<compile_context>
chip_gen: v7x
topology: tpu7x:2x2x1
jax: 0.10.0
libtpu: 0.0.40
codegen_flags: <defaults>
</compile_context>

<pallas_src>
import functools

import jax
import jax.numpy as jnp
from jax import lax
from jax.experimental import pallas as pl
from jax.experimental.pallas import tpu as pltpu

BN_EPS = 1e-5
LANE = 128                      # channel / K axes padded to multiples of the lane width
BN_TILE_M = 512                 # rows per tile for the HBM-bound BN kernels
GEMM_TILE_M = 512               # rows per tile for conv-as-GEMM / 1x1 GEMM
TAPS_TILE_M = 256               # in-kernel M sub-tile for the 9-tap conv path
COMPUTE_DTYPE = jnp.bfloat16    # MXU input dtype (f32 accumulation)


def _round_up(x, m):
    return (x + m - 1) // m * m


def _pad_last(x, target):
    pad = target - x.shape[-1]
    if pad == 0:
        return x
    return jnp.pad(x, [(0, 0)] * (x.ndim - 1) + [(0, pad)])


@functools.lru_cache(maxsize=None)
def _vmem_limit_bytes():
    """Per-chip scoped-VMEM budget: ~48 MiB on v7x (64 MiB VMEM), ~96 MiB on
    v5e/v6e (128 MiB VMEM), conservative 32 MiB fallback."""
    try:
        cap = int(pltpu.get_tpu_info().vmem_capacity_bytes)
    except Exception:
        return 32 * 1024 * 1024
    return int(max(32 * 1024 * 1024, min(cap * 3 // 4, 96 * 1024 * 1024)))


def _cparams(*sems):
    return pltpu.CompilerParams(dimension_semantics=sems,
                                vmem_limit_bytes=_vmem_limit_bytes())


# --------------------------- BatchNorm + ReLU ------------------------------ #

def _bn_stats_partial_kernel(x_ref, sum_ref, sumsq_ref):
    """Per-tile per-channel sum / sum-of-squares partials ("parallel" grid)."""
    x = x_ref[...]
    sum_ref[0] = jnp.sum(x, axis=0, keepdims=True)
    sumsq_ref[0] = jnp.sum(x * x, axis=0, keepdims=True)


def bn_stats(x2d):
    """x2d: [M, Cp] f32 (Cp % 128 == 0).  Returns per-channel (sum, sumsq), each [Cp]."""
    M, Cp = x2d.shape
    tm = min(BN_TILE_M, _round_up(M, 16))
    Mp = _round_up(M, tm)
    xp = x2d if Mp == M else jnp.pad(x2d, ((0, Mp - M), (0, 0)))
    nt = Mp // tm
    s, ss = pl.pallas_call(
        _bn_stats_partial_kernel,
        out_shape=(jax.ShapeDtypeStruct((nt, 1, Cp), jnp.float32),
                   jax.ShapeDtypeStruct((nt, 1, Cp), jnp.float32)),
        grid=(nt,),
        in_specs=[pl.BlockSpec((tm, Cp), lambda i: (i, 0))],
        out_specs=(pl.BlockSpec((1, 1, Cp), lambda i: (i, 0, 0)),
                   pl.BlockSpec((1, 1, Cp), lambda i: (i, 0, 0))),
        compiler_params=_cparams("parallel"),
    )(xp)
    return jnp.sum(s, axis=(0, 1)), jnp.sum(ss, axis=(0, 1))


def bn_scale_shift(ch_sum, ch_sumsq, count, gamma, beta):
    """Tiny per-channel math in plain XLA (biased variance, train-mode BN)."""
    # TODO(synk): f32 sum / sum-of-squares can catastrophically cancel for very
    # large N*H*W; switch to per-tile centered partials / Welford for big batches.
    inv = jnp.float32(1.0 / count)
    mean = ch_sum * inv
    var = jnp.maximum(ch_sumsq * inv - mean * mean, 0.0)
    scale = gamma * lax.rsqrt(var + BN_EPS)
    shift = beta - mean * scale
    return scale.reshape(1, -1), shift.reshape(1, -1)


def _bn_apply_relu_kernel(x_ref, scale_ref, shift_ref, o32_ref, o16_ref):
    """y = max(x*scale + shift, 0); emits f32 (returned relu) and bf16 (conv input)."""
    y = jnp.maximum(x_ref[...] * scale_ref[...] + shift_ref[...], 0.0)
    o32_ref[...] = y
    o16_ref[...] = y.astype(COMPUTE_DTYPE)


def bn_apply_relu(x2d, scale, shift):
    M, Cp = x2d.shape
    tm = min(BN_TILE_M, _round_up(M, 16))
    Mp = _round_up(M, tm)
    xp = x2d if Mp == M else jnp.pad(x2d, ((0, Mp - M), (0, 0)))
    grid = (Mp // tm,)
    # Grid-invariant scale/shift blocks are only fetched once (block index never
    # changes), so the double buffer costs ~1 KiB -- pl.Buffered(1) not needed.
    y32, y16 = pl.pallas_call(
        _bn_apply_relu_kernel,
        out_shape=(jax.ShapeDtypeStruct((Mp, Cp), jnp.float32),
                   jax.ShapeDtypeStruct((Mp, Cp), COMPUTE_DTYPE)),
        grid=grid,
        in_specs=[pl.BlockSpec((tm, Cp), lambda i: (i, 0)),
                  pl.BlockSpec((1, Cp), lambda i: (0, 0)),
                  pl.BlockSpec((1, Cp), lambda i: (0, 0))],
        out_specs=(pl.BlockSpec((tm, Cp), lambda i: (i, 0)),
                   pl.BlockSpec((tm, Cp), lambda i: (i, 0))),
        compiler_params=_cparams("parallel"),
    )(xp, scale, shift)
    return y32[:M], y16[:M]


# ------------------------- M-tiled GEMM (+ fused epilogues) ------------------ #

def _make_gemm_kernel(with_res, with_stats):
    assert not (with_res and with_stats)

    if with_res:
        def kernel(a_ref, w_ref, r_ref, o_ref):
            o_ref[...] = (jnp.dot(a_ref[...], w_ref[...],
                                  preferred_element_type=jnp.float32)
                          + r_ref[...])
    elif with_stats:
        def kernel(a_ref, w_ref, o_ref, s_ref, ss_ref):
            y = jnp.dot(a_ref[...], w_ref[...], preferred_element_type=jnp.float32)
            o_ref[...] = y
            s_ref[0] = jnp.sum(y, axis=0, keepdims=True)
            ss_ref[0] = jnp.sum(y * y, axis=0, keepdims=True)
    else:
        def kernel(a_ref, w_ref, o_ref):
            o_ref[...] = jnp.dot(a_ref[...], w_ref[...],
                                 preferred_element_type=jnp.float32)
    return kernel


def gemm(a, w, *, residual=None, want_stats=False):
    """[M,K](bf16) @ [K,Nc](bf16) -> [M,Nc] f32.  M-tiled ("parallel"), weights
    resident.  Optionally fuses an f32 residual add or per-channel sum/sumsq
    partials (for the following BatchNorm) into the epilogue."""
    M, K = a.shape
    Nc = w.shape[1]
    tm = min(GEMM_TILE_M, _round_up(M, 16))
    Mp = _round_up(M, tm)
    nt = Mp // tm
    ap = a if Mp == M else jnp.pad(a, ((0, Mp - M), (0, 0)))

    in_specs = [pl.BlockSpec((tm, K), lambda i: (i, 0)),
                pl.BlockSpec((K, Nc), lambda i: (0, 0))]
    args = [ap, w]
    if residual is not None:
        r = residual if Mp == M else jnp.pad(residual, ((0, Mp - M), (0, 0)))
        args.append(r)
        in_specs.append(pl.BlockSpec((tm, Nc), lambda i: (i, 0)))

    out_shape = [jax.ShapeDtypeStruct((Mp, Nc), jnp.float32)]
    out_specs = [pl.BlockSpec((tm, Nc), lambda i: (i, 0))]
    if want_stats:
        out_shape += [jax.ShapeDtypeStruct((nt, 1, Nc), jnp.float32)] * 2
        out_specs += [pl.BlockSpec((1, 1, Nc), lambda i: (i, 0, 0))] * 2

    res = pl.pallas_call(
        _make_gemm_kernel(residual is not None, want_stats),
        out_shape=tuple(out_shape),
        grid=(nt,),
        in_specs=in_specs,
        out_specs=tuple(out_specs),
        compiler_params=_cparams("parallel"),
    )(*args)

    if want_stats:
        o, s, ss = res
        return o[:M], jnp.sum(s, axis=(0, 1)), jnp.sum(ss, axis=(0, 1))
    o = res[0] if isinstance(res, (tuple, list)) else res
    return o[:M], None, None


# -------------------- 3x3 conv, small-channel path (K = 9*Cin) --------------- #

def _build_patches(a, cin, stride, k_pad):
    """Concatenate the 9 taps along K (only the *true* cin channels) -> one GEMM."""
    N, H, W, _ = a.shape
    s = stride
    Ho = (H - 1) // s + 1
    Wo = (W - 1) // s + 1
    xp = jnp.pad(a[..., :cin], ((0, 0), (1, 1), (1, 1), (0, 0)))
    cols = [xp[:, kh:kh + s * (Ho - 1) + 1:s, kw:kw + s * (Wo - 1) + 1:s, :]
            for kh in range(3) for kw in range(3)]
    p = jnp.concatenate(cols, axis=-1)                       # (N, Ho, Wo, 9*cin)
    p = jnp.pad(p, ((0, 0), (0, 0), (0, 0), (0, k_pad - 9 * cin)))
    return p.reshape(N * Ho * Wo, k_pad)


def _conv3x3_gemm(a, w_oihw, stride, residual, want_stats):
    N, H, W, _ = a.shape
    cout, cin = w_oihw.shape[0], w_oihw.shape[1]
    coutp = _round_up(cout, LANE)
    Ho = (H - 1) // stride + 1
    Wo = (W - 1) // stride + 1
    k_pad = _round_up(9 * cin, LANE)
    patches = _build_patches(a, cin, stride, k_pad)
    wk = _prep_w3x3_gemm(w_oihw, k_pad, coutp)
    res_flat = (residual.reshape(N * Ho * Wo, coutp)
                if residual is not None else None)
    out, ch_sum, ch_sumsq = gemm(patches, wk, residual=res_flat,
                                 want_stats=want_stats)
    return out.reshape(N, Ho, Wo, coutp), ch_sum, ch_sumsq


# -------------------- 3x3 conv, wide-channel path (9 tap GEMMs) --------------- #
# Per image the padded activation is split into s*s stride-phases, each flattened
# row-major over (rows, cols) with Wg = Wo + 2//s columns per output row; every tap
# (kh, kw) is then a contiguous slice F[phase][off : off+mt] with
# off = (kh//s)*Wg + (kw//s).  The <=2 garbage columns per row are masked out of the
# fused bn-stats and sliced off by the wrapper.

def _make_taps_kernel(taps, mt, n_sub, Mw, Wg, Wo, with_res, with_stats):
    assert not (with_res and with_stats)
    inv_wg = 1.0 / Wg

    def compute_tile(a_ref, w_ref, m0, tco):
        acc = jnp.zeros((mt, tco), jnp.float32)
        # TODO(synk): tap offsets are not sublane-aligned; staging the <=3
        # kw-shifted copies in VMEM scratch (or pltpu.roll) would avoid implicit
        # retile copies, at the cost of extra Wg padding -- marginal at Wo <= 32.
        for t, (phase, off) in enumerate(taps):
            av = a_ref[0, phase, off + m0: off + m0 + mt, :]
            acc = acc + jnp.dot(av, w_ref[t], preferred_element_type=jnp.float32)
        return acc

    if with_res:
        def kernel(a_ref, w_ref, r_ref, o_ref):
            tco = o_ref.shape[-1]
            for ti in range(n_sub):
                m0 = ti * mt
                acc = compute_tile(a_ref, w_ref, m0, tco)
                o_ref[0, m0:m0 + mt, :] = acc + r_ref[0, m0:m0 + mt, :]
    elif with_stats:
        def kernel(a_ref, w_ref, o_ref, s_ref, ss_ref):
            tco = o_ref.shape[-1]
            csum = jnp.zeros((1, tco), jnp.float32)
            csq = jnp.zeros((1, tco), jnp.float32)
            for ti in range(n_sub):
                m0 = ti * mt
                acc = compute_tile(a_ref, w_ref, m0, tco)
                o_ref[0, m0:m0 + mt, :] = acc
                # Mask garbage columns (col >= Wo) and padded rows (>= Mw) out of
                # the fused bn-stats.  Column index recovered with f32 arithmetic
                # (no vector integer div): values are exact in f32 and the +0.5
                # offset keeps floor() away from rounding boundaries.
                rows = (m0 + lax.broadcasted_iota(jnp.int32, (mt, 1), 0)
                        ).astype(jnp.float32)
                q = jnp.floor((rows + 0.5) * inv_wg)
                col = rows - q * Wg
                valid = (col < Wo - 0.5) & (rows < Mw - 0.5)
                accm = jnp.where(valid, acc, 0.0)
                csum = csum + jnp.sum(accm, axis=0, keepdims=True)
                csq = csq + jnp.sum(accm * accm, axis=0, keepdims=True)
            s_ref[0] = csum
            ss_ref[0] = csq
    else:
        def kernel(a_ref, w_ref, o_ref):
            tco = o_ref.shape[-1]
            for ti in range(n_sub):
                m0 = ti * mt
                o_ref[0, m0:m0 + mt, :] = compute_tile(a_ref, w_ref, m0, tco)
    return kernel


def _conv3x3_taps(a, w_oihw, stride, residual, want_stats):
    N, H, W, Cp = a.shape
    s = stride
    cout = w_oihw.shape[0]
    coutp = _round_up(cout, LANE)
    Ho = (H - 1) // s + 1
    Wo = (W - 1) // s + 1
    Hg = Ho + 2 // s
    Wg = Wo + 2 // s
    Mw = Ho * Wg
    mt = Wg * max(1, min(TAPS_TILE_M, Mw) // Wg)          # whole output rows per subtile
    n_sub = pl.cdiv(Mw, mt)
    Mwp = n_sub * mt
    max_off = (2 // s) * Wg + (2 // s)
    L = Mwp + max_off

    # TODO(synk): the pad/stride-phase/flatten prep and the widened->valid slice of
    # the output are each ~one activation-sized XLA pass; writing the BN-apply output
    # directly into this layout (and consuming the widened output directly) would
    # remove them.
    xp = jnp.pad(a, ((0, 0), (1, s * Hg - H - 1), (1, s * Wg - W - 1), (0, 0)))
    phases = jnp.stack(
        [xp[:, bh::s, bw::s, :] for bh in range(s) for bw in range(s)], axis=1)
    flat = phases.reshape(N, s * s, Hg * Wg, Cp)
    flat = jnp.pad(flat, ((0, 0), (0, 0), (0, L - Hg * Wg), (0, 0)))

    w9 = _prep_w3x3_taps(w_oihw, Cp, coutp)
    taps = tuple(((kh % s) * s + (kw % s), (kh // s) * Wg + (kw // s))
                 for kh in range(3) for kw in range(3))

    tco = LANE
    n_co = coutp // tco
    kernel = _make_taps_kernel(taps, mt, n_sub, Mw, Wg, Wo,
                               residual is not None, want_stats)

    in_specs = [pl.BlockSpec((1, s * s, L, Cp), lambda n, c: (n, 0, 0, 0)),
                pl.BlockSpec((9, Cp, tco), lambda n, c: (0, 0, c))]
    args = [flat, w9]
    if residual is not None:
        r = jnp.pad(residual, ((0, 0), (0, 0), (0, Wg - Wo), (0, 0)))
        r = r.reshape(N, Mw, coutp)
        if Mwp != Mw:
            r = jnp.pad(r, ((0, 0), (0, Mwp - Mw), (0, 0)))
        args.append(r)
        in_specs.append(pl.BlockSpec((1, Mwp, tco), lambda n, c: (n, 0, c)))

    out_shape = [jax.ShapeDtypeStruct((N, Mwp, coutp), jnp.float32)]
    out_specs = [pl.BlockSpec((1, Mwp, tco), lambda n, c: (n, 0, c))]
    if want_stats:
        out_shape += [jax.ShapeDtypeStruct((N, 1, coutp), jnp.float32)] * 2
        out_specs += [pl.BlockSpec((1, 1, tco), lambda n, c: (n, 0, c))] * 2

    res = pl.pallas_call(
        kernel,
        out_shape=tuple(out_shape),
        grid=(N, n_co),
        in_specs=in_specs,
        out_specs=tuple(out_specs),
        compiler_params=_cparams("parallel", "parallel"),
    )(*args)

    if want_stats:
        out, ps, pss = res
        ch_sum = jnp.sum(ps, axis=(0, 1))
        ch_sumsq = jnp.sum(pss, axis=(0, 1))
    else:
        out = res[0] if isinstance(res, (tuple, list)) else res
        ch_sum = ch_sumsq = None

    out = out[:, :Mw, :].reshape(N, Ho, Wg, coutp)[:, :, :Wo, :]
    return out, ch_sum, ch_sumsq


def conv3x3(a, w_oihw, stride, *, residual=None, want_stats=False):
    """3x3 conv, padding=1, no bias (PyTorch semantics), stride in {1, 2}.

    a:        [N, H, W, Cin_p] bf16, channels zero-padded to a multiple of 128.
    residual: optional [N, Ho, Wo, Cout_p] f32, added in the epilogue.
    want_stats: also return per-channel sum / sum-of-squares of the conv output
                (fused epilogue; used by the following BatchNorm).
    Returns (out [N, Ho, Wo, Cout_p] f32, ch_sum|None, ch_sumsq|None)."""
    assert stride in (1, 2)
    cin = w_oihw.shape[1]
    assert a.shape[-1] == _round_up(cin, LANE)
    if cin < LANE:
        return _conv3x3_gemm(a, w_oihw, stride, residual, want_stats)
    return _conv3x3_taps(a, w_oihw, stride, residual, want_stats)


# --------------------------- parameter packing ------------------------------ #

def _prep_w3x3_taps(w_oihw, cin_p, cout_p):
    cout, cin = w_oihw.shape[0], w_oihw.shape[1]
    w = jnp.transpose(w_oihw, (2, 3, 1, 0)).reshape(9, cin, cout)
    w = jnp.pad(w, ((0, 0), (0, cin_p - cin), (0, cout_p - cout)))
    return w.astype(COMPUTE_DTYPE)


def _prep_w3x3_gemm(w_oihw, k_pad, cout_p):
    cout, cin = w_oihw.shape[0], w_oihw.shape[1]
    w = jnp.transpose(w_oihw, (2, 3, 1, 0)).reshape(9 * cin, cout)
    w = jnp.pad(w, ((0, k_pad - 9 * cin), (0, cout_p - cout)))
    return w.astype(COMPUTE_DTYPE)


def _prep_w1x1(w_oihw, cin_p, cout_p):
    cout, cin = w_oihw.shape[0], w_oihw.shape[1]
    w = jnp.transpose(w_oihw.reshape(cout, cin), (1, 0))
    w = jnp.pad(w, ((0, cin_p - cin), (0, cout_p - cout)))
    return w.astype(COMPUTE_DTYPE)


# ----------------------------- PreActBlock forward -------------------------- #

def preact_block_forward(x_nchw, params, *, stride):
    assert stride in (1, 2)
    N, Cin, H, W = x_nchw.shape
    planes = params["w1"].shape[0]
    cin_p = _round_up(Cin, LANE)
    cout_p = _round_up(planes, LANE)

    x = jnp.transpose(x_nchw, (0, 2, 3, 1)).astype(jnp.float32)      # NHWC
    x_p = _pad_last(x, cin_p)

    g1 = _pad_last(params["bn1_gamma"].astype(jnp.float32), cin_p)
    b1 = _pad_last(params["bn1_beta"].astype(jnp.float32), cin_p)
    g2 = _pad_last(params["bn2_gamma"].astype(jnp.float32), cout_p)
    b2 = _pad_last(params["bn2_beta"].astype(jnp.float32), cout_p)

    M1 = N * H * W
    Ho = (H - 1) // stride + 1
    Wo = (W - 1) // stride + 1
    M2 = N * Ho * Wo

    # bn1 + relu (two-stage stats; apply emits f32 for the return, bf16 for the MXU).
    s1, ss1 = bn_stats(x_p.reshape(M1, cin_p))
    scale1, shift1 = bn_scale_shift(s1, ss1, M1, g1, b1)
    relu1_f32, relu1_bf16 = bn_apply_relu(x_p.reshape(M1, cin_p), scale1, shift1)
    relu1_f32 = relu1_f32.reshape(N, H, W, cin_p)
    relu1_bf16 = relu1_bf16.reshape(N, H, W, cin_p)

    # shortcut: projection uses relu1, identity uses the raw input x.
    if "w_sc" in params:
        w_sc = _prep_w1x1(params["w_sc"], cin_p, cout_p)
        # TODO(synk): the strided slice is one small XLA gather pass; folding the
        # stride into the GEMM's BlockSpec index_map would remove it.
        xs = relu1_bf16[:, ::stride, ::stride, :]
        shortcut, _, _ = gemm(xs.reshape(M2, cin_p), w_sc)
        shortcut = shortcut.reshape(N, Ho, Wo, cout_p)
    else:
        assert stride == 1 and cin_p == cout_p, (
            "identity shortcut requires stride==1 and matching (padded) channels")
        shortcut = x_p                                        # H==Ho, W==Wo here

    # conv1 with bn2's sum/sumsq fused into its epilogue (no extra HBM read of out1).
    out1, s2, ss2 = conv3x3(relu1_bf16, params["w1"], stride, want_stats=True)

    # bn2 + relu
    scale2, shift2 = bn_scale_shift(s2, ss2, M2, g2, b2)
    relu2_f32, relu2_bf16 = bn_apply_relu(out1.reshape(M2, cout_p), scale2, shift2)
    relu2_f32 = relu2_f32.reshape(N, Ho, Wo, cout_p)
    relu2_bf16 = relu2_bf16.reshape(N, Ho, Wo, cout_p)

    # conv2 with the shortcut add fused into its epilogue.
    out, _, _ = conv3x3(relu2_bf16, params["w2"], 1, residual=shortcut)

    to_nchw = lambda t: jnp.transpose(t, (0, 3, 1, 2))
    return (to_nchw(relu1_f32[..., :Cin]),
            to_nchw(relu2_f32[..., :planes]),
            to_nchw(out[..., :planes]))


# ----------------------------- pure-JAX reference --------------------------- #

def _reference(x_nchw, params, stride, conv_dtype):
    def bn(x, g, b):
        mean = jnp.mean(x, axis=(0, 2, 3), keepdims=True)
        var = jnp.mean((x - mean) ** 2, axis=(0, 2, 3), keepdims=True)
        return ((x - mean) * lax.rsqrt(var + BN_EPS) * g[None, :, None, None]
                + b[None, :, None, None])

    def conv(x, w, s, pad):
        return lax.conv_general_dilated(
            x.astype(conv_dtype), w.astype(conv_dtype), (s, s),
            [(pad, pad), (pad, pad)],
            dimension_numbers=("NCHW", "OIHW", "NCHW"),
            preferred_element_type=jnp.float32)

    relu1 = jnp.maximum(bn(x_nchw, params["bn1_gamma"], params["bn1_beta"]), 0.0)
    shortcut = conv(relu1, params["w_sc"], stride, 0) if "w_sc" in params else x_nchw
    out1 = conv(relu1, params["w1"], stride, 1)
    relu2 = jnp.maximum(bn(out1, params["bn2_gamma"], params["bn2_beta"]), 0.0)
    out = conv(relu2, params["w2"], 1, 1) + shortcut
    return relu1, relu2, out


# ----------------------------------- main ----------------------------------- #

def _make_inputs(key, N, in_planes, planes, stride, H, W):
    ks = jax.random.split(key, 8)
    x = jax.random.normal(ks[0], (N, in_planes, H, W), jnp.float32)
    params = {
        "w1": 0.1 * jax.random.normal(ks[1], (planes, in_planes, 3, 3), jnp.float32),
        "w2": 0.1 * jax.random.normal(ks[2], (planes, planes, 3, 3), jnp.float32),
        "bn1_gamma": 1.0 + 0.1 * jax.random.normal(ks[3], (in_planes,), jnp.float32),
        "bn1_beta": 0.1 * jax.random.normal(ks[4], (in_planes,), jnp.float32),
        "bn2_gamma": 1.0 + 0.1 * jax.random.normal(ks[5], (planes,), jnp.float32),
        "bn2_beta": 0.1 * jax.random.normal(ks[6], (planes,), jnp.float32),
    }
    if stride != 1 or in_planes != planes:
        params["w_sc"] = 0.1 * jax.random.normal(
            ks[7], (planes, in_planes, 1, 1), jnp.float32)
    return x, params


def _run_config(name, key, *, in_planes, planes, stride, N, H, W):
    x, params = _make_inputs(key, N, in_planes, planes, stride, H, W)
    fwd = jax.jit(functools.partial(preact_block_forward, stride=stride))
    relu1, relu2, out = fwd(x, params)
    jax.block_until_ready(out)

    Ho, Wo = H // stride, W // stride
    assert relu1.shape == (N, in_planes, H, W), name
    assert relu2.shape == (N, planes, Ho, Wo), name
    assert out.shape == (N, planes, Ho, Wo), name

    # (a) bf16-matched reference (same MXU input precision): tight check.
    r1b, r2b, ob = _reference(x, params, stride, conv_dtype=jnp.bfloat16)
    # (b) full-f32 reference (exact PyTorch math): loose check; the only intended
    #     deviation is the bf16 cast of the conv inputs for the MXU.
    r1f, r2f, of = _reference(x, params, stride, conv_dtype=jnp.float32)

    assert jnp.allclose(relu1, r1f, atol=1e-4, rtol=1e-4), name   # BN path is pure f32
    assert jnp.allclose(relu2, r2b, atol=1e-2, rtol=1e-2), name
    assert jnp.allclose(out, ob, atol=1e-2, rtol=1e-2), name
    assert jnp.allclose(relu2, r2f, atol=5e-2, rtol=5e-2), name
    assert jnp.allclose(out, of, atol=5e-2, rtol=5e-2), name


if __name__ == "__main__":
    key = jax.random.PRNGKey(0)
    k_small, k_wide = jax.random.split(key)
    # Config A: small channels (single-GEMM / K=9*Cin conv path), projection shortcut.
    _run_config("small-channel", k_small,
                in_planes=4, planes=8, stride=2, N=2, H=16, W=16)
    # Config B: wide channels (9-tap stride-phase conv path), identity shortcut.
    _run_config("wide-channel", k_wide,
                in_planes=128, planes=128, stride=1, N=1, H=8, W=8)
    print("KERNEL_OK")
</pallas_src>

<mosaic_0001>
module attributes {stable_mosaic.version = 11 : i64} {
  func.func @_bn_stats_partial_kernel(%arg0: i32, %arg1: memref<512x128xf32, #tpu.memory_space<vmem>>, %arg2: memref<1x1x128xf32, #tpu.memory_space<vmem>>, %arg3: memref<1x1x128xf32, #tpu.memory_space<vmem>>) attributes {dimension_semantics = [#tpu.dimension_semantics<parallel>], iteration_bounds = array<i64: 1>, scalar_prefetch = 0 : i64, scratch_operands = 0 : i64, tpu.core_type = #tpu.core_type<tc>, window_params = [{transform_indices = @transform_0, window_bounds = array<i64: 512, 128>}, {transform_indices = @transform_1, window_bounds = array<i64: 1, 1, 128>}, {transform_indices = @transform_2, window_bounds = array<i64: 1, 1, 128>}]} {
    %c0 = arith.constant 0 : index
    %c0_0 = arith.constant 0 : index
    %0 = vector.load %arg1[%c0, %c0_0] : memref<512x128xf32, #tpu.memory_space<vmem>>, vector<512x128xf32>
    %cst = arith.constant dense<0.000000e+00> : vector<128xf32>
    %1 = vector.multi_reduction <add>, %0, %cst [0] : vector<512x128xf32> to vector<128xf32>
    %2 = vector.shape_cast %1 : vector<128xf32> to vector<1x128xf32>
    %c0_1 = arith.constant 0 : index
    %c0_2 = arith.constant 0 : index
    %c0_3 = arith.constant 0 : index
    %3 = vector.load %arg2[%c0_1, %c0_2, %c0_3] : memref<1x1x128xf32, #tpu.memory_space<vmem>>, vector<1x1x128xf32>
    %4 = vector.shape_cast %3 : vector<1x1x128xf32> to vector<1x128xf32>
    %5 = vector.shape_cast %2 : vector<1x128xf32> to vector<1x1x128xf32>
    tpu.vector_store %arg2[%c0_1, %c0_2, %c0_3], %5 {strides = array<i32>} : memref<1x1x128xf32, #tpu.memory_space<vmem>>, vector<1x1x128xf32>,
    %6 = arith.mulf %0, %0 : vector<512x128xf32>
    %cst_4 = arith.constant dense<0.000000e+00> : vector<128xf32>
    %7 = vector.multi_reduction <add>, %6, %cst_4 [0] : vector<512x128xf32> to vector<128xf32>
    %8 = vector.shape_cast %7 : vector<128xf32> to vector<1x128xf32>
    %c0_5 = arith.constant 0 : index
    %c0_6 = arith.constant 0 : index
    %c0_7 = arith.constant 0 : index
    %9 = vector.load %arg3[%c0_5, %c0_6, %c0_7] : memref<1x1x128xf32, #tpu.memory_space<vmem>>, vector<1x1x128xf32>
    %10 = vector.shape_cast %9 : vector<1x1x128xf32> to vector<1x128xf32>
    %11 = vector.shape_cast %8 : vector<1x128xf32> to vector<1x1x128xf32>
    tpu.vector_store %arg3[%c0_5, %c0_6, %c0_7], %11 {strides = array<i32>} : memref<1x1x128xf32, #tpu.memory_space<vmem>>, vector<1x1x128xf32>,
    return
  }
  func.func @transform_0(%arg0: i32) -> (i32, i32) {
    %c0_i32 = arith.constant 0 : i32
    %c0_i32_0 = arith.constant 0 : i32
    return %arg0, %c0_i32 : i32, i32
  }
  func.func @transform_1(%arg0: i32) -> (i32, i32, i32) {
    %c0_i32 = arith.constant 0 : i32
    %c0_i32_0 = arith.constant 0 : i32
    %c0_i32_1 = arith.constant 0 : i32
    return %arg0, %c0_i32, %c0_i32_0 : i32, i32, i32
  }
  func.func @transform_2(%arg0: i32) -> (i32, i32, i32) {
    %c0_i32 = arith.constant 0 : i32
    %c0_i32_0 = arith.constant 0 : i32
    %c0_i32_1 = arith.constant 0 : i32
    return %arg0, %c0_i32, %c0_i32_0 : i32, i32, i32
  }
}

module attributes {stable_mosaic.version = 11 : i64} {
  func.func @_bn_apply_relu_kernel(%arg0: i32, %arg1: memref<512x128xf32, #tpu.memory_space<vmem>>, %arg2: memref<1x128xf32, #tpu.memory_space<vmem>>, %arg3: memref<1x128xf32, #tpu.memory_space<vmem>>, %arg4: memref<512x128xf32, #tpu.memory_space<vmem>>, %arg5: memref<512x128xbf16, #tpu.memory_space<vmem>>) attributes {dimension_semantics = [#tpu.dimension_semantics<parallel>], iteration_bounds = array<i64: 1>, scalar_prefetch = 0 : i64, scratch_operands = 0 : i64, tpu.core_type = #tpu.core_type<tc>, window_params = [{transform_indices = @transform_0, window_bounds = array<i64: 512, 128>}, {pipeline_mode = #tpu.pipeline_mode<synchronous>, transform_indices = @transform_1, window_bounds = array<i64: 1, 128>}, {pipeline_mode = #tpu.pipeline_mode<synchronous>, transform_indices = @transform_2, window_bounds = array<i64: 1, 128>}, {transform_indices = @transform_3, window_bounds = array<i64: 512, 128>}, {transform_indices = @transform_4, window_bounds = array<i64: 512, 128>}]} {
    %c0 = arith.constant 0 : index
    %c0_0 = arith.constant 0 : index
    %0 = vector.load %arg1[%c0, %c0_0] : memref<512x128xf32, #tpu.memory_space<vmem>>, vector<512x128xf32>
    %c0_1 = arith.constant 0 : index
    %c0_2 = arith.constant 0 : index
    %1 = vector.load %arg2[%c0_1, %c0_2] : memref<1x128xf32, #tpu.memory_space<vmem>>, vector<1x128xf32>
    %2 = vector.broadcast %1 : vector<1x128xf32> to vector<512x128xf32>
    %3 = arith.mulf %0, %2 : vector<512x128xf32>
    %c0_3 = arith.constant 0 : index
    %c0_4 = arith.constant 0 : index
    %4 = vector.load %arg3[%c0_3, %c0_4] : memref<1x128xf32, #tpu.memory_space<vmem>>, vector<1x128xf32>
    %5 = vector.broadcast %4 : vector<1x128xf32> to vector<512x128xf32>
    %6 = arith.addf %3, %5 : vector<512x128xf32>
    %cst = arith.constant 0.000000e+00 : f32
    %7 = vector.broadcast %cst : f32 to vector<512x128xf32>
    %8 = arith.maximumf %6, %7 : vector<512x128xf32>
    %c0_5 = arith.constant 0 : index
    %c0_6 = arith.constant 0 : index
    %9 = vector.load %arg4[%c0_5, %c0_6] : memref<512x128xf32, #tpu.memory_space<vmem>>, vector<512x128xf32>
    tpu.vector_store %arg4[%c0_5, %c0_6], %8 {strides = array<i32>} : memref<512x128xf32, #tpu.memory_space<vmem>>, vector<512x128xf32>,
    %10 = arith.truncf %8 : vector<512x128xf32> to vector<512x128xbf16>
    %c0_7 = arith.constant 0 : index
    %c0_8 = arith.constant 0 : index
    %11 = vector.load %arg5[%c0_7, %c0_8] : memref<512x128xbf16, #tpu.memory_space<vmem>>, vector<512x128xbf16>
    tpu.vector_store %arg5[%c0_7, %c0_8], %10 {strides = array<i32>} : memref<512x128xbf16, #tpu.memory_space<vmem>>, vector<512x128xbf16>,
    return
  }
  func.func @transform_0(%arg0: i32) -> (i32, i32) {
    %c0_i32 = arith.constant 0 : i32
    %c0_i32_0 = arith.constant 0 : i32
    return %arg0, %c0_i32 : i32, i32
  }
  func.func @transform_1(%arg0: i32) -> (i32, i32) {
    %c0_i32 = arith.constant 0 : i32
    %c0_i32_0 = arith.constant 0 : i32
    %c0_i32_1 = arith.constant 0 : i32
    return %c0_i32, %c0_i32_0 : i32, i32
  }
  func.func @transform_2(%arg0: i32) -> (i32, i32) {
    %c0_i32 = arith.constant 0 : i32
    %c0_i32_0 = arith.constant 0 : i32
    %c0_i32_1 = arith.constant 0 : i32
    return %c0_i32, %c0_i32_0 : i32, i32
  }
  func.func @transform_3(%arg0: i32) -> (i32, i32) {
    %c0_i32 = arith.constant 0 : i32
    %c0_i32_0 = arith.constant 0 : i32
    return %arg0, %c0_i32 : i32, i32
  }
  func.func @transform_4(%arg0: i32) -> (i32, i32) {
    %c0_i32 = arith.constant 0 : i32
    %c0_i32_0 = arith.constant 0 : i32
    return %arg0, %c0_i32 : i32, i32
  }
}

module attributes {stable_mosaic.version = 11 : i64} {
  func.func @kernel(%arg0: i32, %arg1: memref<128x128xbf16, #tpu.memory_space<vmem>>, %arg2: memref<128x128xbf16, #tpu.memory_space<vmem>>, %arg3: memref<128x128xf32, #tpu.memory_space<vmem>>, %arg4: memref<1x1x128xf32, #tpu.memory_space<vmem>>, %arg5: memref<1x1x128xf32, #tpu.memory_space<vmem>>) attributes {dimension_semantics = [#tpu.dimension_semantics<parallel>], iteration_bounds = array<i64: 1>, scalar_prefetch = 0 : i64, scratch_operands = 0 : i64, tpu.core_type = #tpu.core_type<tc>, window_params = [{transform_indices = @transform_0, window_bounds = array<i64: 128, 128>}, {pipeline_mode = #tpu.pipeline_mode<synchronous>, transform_indices = @transform_1, window_bounds = array<i64: 128, 128>}, {transform_indices = @transform_2, window_bounds = array<i64: 128, 128>}, {transform_indices = @transform_3, window_bounds = array<i64: 1, 1, 128>}, {transform_indices = @transform_4, window_bounds = array<i64: 1, 1, 128>}]} {
    %c0 = arith.constant 0 : index
    %c0_0 = arith.constant 0 : index
    %0 = vector.load %arg1[%c0, %c0_0] : memref<128x128xbf16, #tpu.memory_space<vmem>>, vector<128x128xbf16>
    %c0_1 = arith.constant 0 : index
    %c0_2 = arith.constant 0 : index
    %1 = vector.load %arg2[%c0_1, %c0_2] : memref<128x128xbf16, #tpu.memory_space<vmem>>, vector<128x128xbf16>
    %cst = arith.constant dense<0.000000e+00> : vector<128x128xf32>
    %2 = tpu.matmul %0, %1, %cst {dimension_numbers = #tpu.dot_dimension_numbers<[1], [0], [0], [1], [0, 0, 1, 1], [], []>} : vector<128x128xbf16>, vector<128x128xbf16>, vector<128x128xf32> -> vector<128x128xf32>
    %c0_3 = arith.constant 0 : index
    %c0_4 = arith.constant 0 : index
    %3 = vector.load %arg3[%c0_3, %c0_4] : memref<128x128xf32, #tpu.memory_space<vmem>>, vector<128x128xf32>
    tpu.vector_store %arg3[%c0_3, %c0_4], %2 {strides = array<i32>} : memref<128x128xf32, #tpu.memory_space<vmem>>, vector<128x128xf32>,
    %cst_5 = arith.constant dense<0.000000e+00> : vector<128xf32>
    %4 = vector.multi_reduction <add>, %2, %cst_5 [0] : vector<128x128xf32> to vector<128xf32>
    %5 = vector.shape_cast %4 : vector<128xf32> to vector<1x128xf32>
    %c0_6 = arith.constant 0 : index
    %c0_7 = arith.constant 0 : index
    %c0_8 = arith.constant 0 : index
    %6 = vector.load %arg4[%c0_6, %c0_7, %c0_8] : memref<1x1x128xf32, #tpu.memory_space<vmem>>, vector<1x1x128xf32>
    %7 = vector.shape_cast %6 : vector<1x1x128xf32> to vector<1x128xf32>
    %8 = vector.shape_cast %5 : vector<1x128xf32> to vector<1x1x128xf32>
    tpu.vector_store %arg4[%c0_6, %c0_7, %c0_8], %8 {strides = array<i32>} : memref<1x1x128xf32, #tpu.memory_space<vmem>>, vector<1x1x128xf32>,
    %9 = arith.mulf %2, %2 : vector<128x128xf32>
    %cst_9 = arith.constant dense<0.000000e+00> : vector<128xf32>
    %10 = vector.multi_reduction <add>, %9, %cst_9 [0] : vector<128x128xf32> to vector<128xf32>
    %11 = vector.shape_cast %10 : vector<128xf32> to vector<1x128xf32>
    %c0_10 = arith.constant 0 : index
    %c0_11 = arith.constant 0 : index
    %c0_12 = arith.constant 0 : index
    %12 = vector.load %arg5[%c0_10, %c0_11, %c0_12] : memref<1x1x128xf32, #tpu.memory_space<vmem>>, vector<1x1x128xf32>
    %13 = vector.shape_cast %12 : vector<1x1x128xf32> to vector<1x128xf32>
    %14 = vector.shape_cast %11 : vector<1x128xf32> to vector<1x1x128xf32>
    tpu.vector_store %arg5[%c0_10, %c0_11, %c0_12], %14 {strides = array<i32>} : memref<1x1x128xf32, #tpu.memory_space<vmem>>, vector<1x1x128xf32>,
    return
  }
  func.func @transform_0(%arg0: i32) -> (i32, i32) {
    %c0_i32 = arith.constant 0 : i32
    %c0_i32_0 = arith.constant 0 : i32
    return %arg0, %c0_i32 : i32, i32
  }
  func.func @transform_1(%arg0: i32) -> (i32, i32) {
    %c0_i32 = arith.constant 0 : i32
    %c0_i32_0 = arith.constant 0 : i32
    %c0_i32_1 = arith.constant 0 : i32
    return %c0_i32, %c0_i32_0 : i32, i32
  }
  func.func @transform_2(%arg0: i32) -> (i32, i32) {
    %c0_i32 = arith.constant 0 : i32
    %c0_i32_0 = arith.constant 0 : i32
    return %arg0, %c0_i32 : i32, i32
  }
  func.func @transform_3(%arg0: i32) -> (i32, i32, i32) {
    %c0_i32 = arith.constant 0 : i32
    %c0_i32_0 = arith.constant 0 : i32
    %c0_i32_1 = arith.constant 0 : i32
    return %arg0, %c0_i32, %c0_i32_0 : i32, i32, i32
  }
  func.func @transform_4(%arg0: i32) -> (i32, i32, i32) {
    %c0_i32 = arith.constant 0 : i32
    %c0_i32_0 = arith.constant 0 : i32
    %c0_i32_1 = arith.constant 0 : i32
    return %arg0, %c0_i32, %c0_i32_0 : i32, i32, i32
  }
}

module attributes {stable_mosaic.version = 11 : i64} {
  func.func @_bn_apply_relu_kernel(%arg0: i32, %arg1: memref<128x128xf32, #tpu.memory_space<vmem>>, %arg2: memref<1x128xf32, #tpu.memory_space<vmem>>, %arg3: memref<1x128xf32, #tpu.memory_space<vmem>>, %arg4: memref<128x128xf32, #tpu.memory_space<vmem>>, %arg5: memref<128x128xbf16, #tpu.memory_space<vmem>>) attributes {dimension_semantics = [#tpu.dimension_semantics<parallel>], iteration_bounds = array<i64: 1>, scalar_prefetch = 0 : i64, scratch_operands = 0 : i64, tpu.core_type = #tpu.core_type<tc>, window_params = [{transform_indices = @transform_0, window_bounds = array<i64: 128, 128>}, {pipeline_mode = #tpu.pipeline_mode<synchronous>, transform_indices = @transform_1, window_bounds = array<i64: 1, 128>}, {pipeline_mode = #tpu.pipeline_mode<synchronous>, transform_indices = @transform_2, window_bounds = array<i64: 1, 128>}, {transform_indices = @transform_3, window_bounds = array<i64: 128, 128>}, {transform_indices = @transform_4, window_bounds = array<i64: 128, 128>}]} {
    %c0 = arith.constant 0 : index
    %c0_0 = arith.constant 0 : index
    %0 = vector.load %arg1[%c0, %c0_0] : memref<128x128xf32, #tpu.memory_space<vmem>>, vector<128x128xf32>
    %c0_1 = arith.constant 0 : index
    %c0_2 = arith.constant 0 : index
    %1 = vector.load %arg2[%c0_1, %c0_2] : memref<1x128xf32, #tpu.memory_space<vmem>>, vector<1x128xf32>
    %2 = vector.broadcast %1 : vector<1x128xf32> to vector<128x128xf32>
    %3 = arith.mulf %0, %2 : vector<128x128xf32>
    %c0_3 = arith.constant 0 : index
    %c0_4 = arith.constant 0 : index
    %4 = vector.load %arg3[%c0_3, %c0_4] : memref<1x128xf32, #tpu.memory_space<vmem>>, vector<1x128xf32>
    %5 = vector.broadcast %4 : vector<1x128xf32> to vector<128x128xf32>
    %6 = arith.addf %3, %5 : vector<128x128xf32>
    %cst = arith.constant 0.000000e+00 : f32
    %7 = vector.broadcast %cst : f32 to vector<128x128xf32>
    %8 = arith.maximumf %6, %7 : vector<128x128xf32>
    %c0_5 = arith.constant 0 : index
    %c0_6 = arith.constant 0 : index
    %9 = vector.load %arg4[%c0_5, %c0_6] : memref<128x128xf32, #tpu.memory_space<vmem>>, vector<128x128xf32>
    tpu.vector_store %arg4[%c0_5, %c0_6], %8 {strides = array<i32>} : memref<128x128xf32, #tpu.memory_space<vmem>>, vector<128x128xf32>,
    %10 = arith.truncf %8 : vector<128x128xf32> to vector<128x128xbf16>
    %c0_7 = arith.constant 0 : index
    %c0_8 = arith.constant 0 : index
    %11 = vector.load %arg5[%c0_7, %c0_8] : memref<128x128xbf16, #tpu.memory_space<vmem>>, vector<128x128xbf16>
    tpu.vector_store %arg5[%c0_7, %c0_8], %10 {strides = array<i32>} : memref<128x128xbf16, #tpu.memory_space<vmem>>, vector<128x128xbf16>,
    return
  }
  func.func @transform_0(%arg0: i32) -> (i32, i32) {
    %c0_i32 = arith.constant 0 : i32
    %c0_i32_0 = arith.constant 0 : i32
    return %arg0, %c0_i32 : i32, i32
  }
  func.func @transform_1(%arg0: i32) -> (i32, i32) {
    %c0_i32 = arith.constant 0 : i32
    %c0_i32_0 = arith.constant 0 : i32
    %c0_i32_1 = arith.constant 0 : i32
    return %c0_i32, %c0_i32_0 : i32, i32
  }
  func.func @transform_2(%arg0: i32) -> (i32, i32) {
    %c0_i32 = arith.constant 0 : i32
    %c0_i32_0 = arith.constant 0 : i32
    %c0_i32_1 = arith.constant 0 : i32
    return %c0_i32, %c0_i32_0 : i32, i32
  }
  func.func @transform_3(%arg0: i32) -> (i32, i32) {
    %c0_i32 = arith.constant 0 : i32
    %c0_i32_0 = arith.constant 0 : i32
    return %arg0, %c0_i32 : i32, i32
  }
  func.func @transform_4(%arg0: i32) -> (i32, i32) {
    %c0_i32 = arith.constant 0 : i32
    %c0_i32_0 = arith.constant 0 : i32
    return %arg0, %c0_i32 : i32, i32
  }
}

module attributes {stable_mosaic.version = 11 : i64} {
  func.func @kernel(%arg0: i32, %arg1: memref<128x128xbf16, #tpu.memory_space<vmem>>, %arg2: memref<128x128xbf16, #tpu.memory_space<vmem>>, %arg3: memref<128x128xf32, #tpu.memory_space<vmem>>) attributes {dimension_semantics = [#tpu.dimension_semantics<parallel>], iteration_bounds = array<i64: 1>, scalar_prefetch = 0 : i64, scratch_operands = 0 : i64, tpu.core_type = #tpu.core_type<tc>, window_params = [{transform_indices = @transform_0, window_bounds = array<i64: 128, 128>}, {pipeline_mode = #tpu.pipeline_mode<synchronous>, transform_indices = @transform_1, window_bounds = array<i64: 128, 128>}, {transform_indices = @transform_2, window_bounds = array<i64: 128, 128>}]} {
    %c0 = arith.constant 0 : index
    %c0_0 = arith.constant 0 : index
    %0 = vector.load %arg1[%c0, %c0_0] : memref<128x128xbf16, #tpu.memory_space<vmem>>, vector<128x128xbf16>
    %c0_1 = arith.constant 0 : index
    %c0_2 = arith.constant 0 : index
    %1 = vector.load %arg2[%c0_1, %c0_2] : memref<128x128xbf16, #tpu.memory_space<vmem>>, vector<128x128xbf16>
    %cst = arith.constant dense<0.000000e+00> : vector<128x128xf32>
    %2 = tpu.matmul %0, %1, %cst {dimension_numbers = #tpu.dot_dimension_numbers<[1], [0], [0], [1], [0, 0, 1, 1], [], []>} : vector<128x128xbf16>, vector<128x128xbf16>, vector<128x128xf32> -> vector<128x128xf32>
    %c0_3 = arith.constant 0 : index
    %c0_4 = arith.constant 0 : index
    %3 = vector.load %arg3[%c0_3, %c0_4] : memref<128x128xf32, #tpu.memory_space<vmem>>, vector<128x128xf32>
    tpu.vector_store %arg3[%c0_3, %c0_4], %2 {strides = array<i32>} : memref<128x128xf32, #tpu.memory_space<vmem>>, vector<128x128xf32>,
    return
  }
  func.func @transform_0(%arg0: i32) -> (i32, i32) {
    %c0_i32 = arith.constant 0 : i32
    %c0_i32_0 = arith.constant 0 : i32
    return %arg0, %c0_i32 : i32, i32
  }
  func.func @transform_1(%arg0: i32) -> (i32, i32) {
    %c0_i32 = arith.constant 0 : i32
    %c0_i32_0 = arith.constant 0 : i32
    %c0_i32_1 = arith.constant 0 : i32
    return %c0_i32, %c0_i32_0 : i32, i32
  }
  func.func @transform_2(%arg0: i32) -> (i32, i32) {
    %c0_i32 = arith.constant 0 : i32
    %c0_i32_0 = arith.constant 0 : i32
    return %arg0, %c0_i32 : i32, i32
  }
}

module attributes {stable_mosaic.version = 11 : i64} {
  func.func @kernel(%arg0: i32, %arg1: memref<128x128xbf16, #tpu.memory_space<vmem>>, %arg2: memref<128x128xbf16, #tpu.memory_space<vmem>>, %arg3: memref<128x128xf32, #tpu.memory_space<vmem>>, %arg4: memref<128x128xf32, #tpu.memory_space<vmem>>) attributes {dimension_semantics = [#tpu.dimension_semantics<parallel>], iteration_bounds = array<i64: 1>, scalar_prefetch = 0 : i64, scratch_operands = 0 : i64, tpu.core_type = #tpu.core_type<tc>, window_params = [{transform_indices = @transform_0, window_bounds = array<i64: 128, 128>}, {pipeline_mode = #tpu.pipeline_mode<synchronous>, transform_indices = @transform_1, window_bounds = array<i64: 128, 128>}, {transform_indices = @transform_2, window_bounds = array<i64: 128, 128>}, {transform_indices = @transform_3, window_bounds = array<i64: 128, 128>}]} {
    %c0 = arith.constant 0 : index
    %c0_0 = arith.constant 0 : index
    %0 = vector.load %arg1[%c0, %c0_0] : memref<128x128xbf16, #tpu.memory_space<vmem>>, vector<128x128xbf16>
    %c0_1 = arith.constant 0 : index
    %c0_2 = arith.constant 0 : index
    %1 = vector.load %arg2[%c0_1, %c0_2] : memref<128x128xbf16, #tpu.memory_space<vmem>>, vector<128x128xbf16>
    %cst = arith.constant dense<0.000000e+00> : vector<128x128xf32>
    %2 = tpu.matmul %0, %1, %cst {dimension_numbers = #tpu.dot_dimension_numbers<[1], [0], [0], [1], [0, 0, 1, 1], [], []>} : vector<128x128xbf16>, vector<128x128xbf16>, vector<128x128xf32> -> vector<128x128xf32>
    %c0_3 = arith.constant 0 : index
    %c0_4 = arith.constant 0 : index
    %3 = vector.load %arg3[%c0_3, %c0_4] : memref<128x128xf32, #tpu.memory_space<vmem>>, vector<128x128xf32>
    %4 = arith.addf %2, %3 : vector<128x128xf32>
    %c0_5 = arith.constant 0 : index
    %c0_6 = arith.constant 0 : index
    %5 = vector.load %arg4[%c0_5, %c0_6] : memref<128x128xf32, #tpu.memory_space<vmem>>, vector<128x128xf32>
    tpu.vector_store %arg4[%c0_5, %c0_6], %4 {strides = array<i32>} : memref<128x128xf32, #tpu.memory_space<vmem>>, vector<128x128xf32>,
    return
  }
  func.func @transform_0(%arg0: i32) -> (i32, i32) {
    %c0_i32 = arith.constant 0 : i32
    %c0_i32_0 = arith.constant 0 : i32
    return %arg0, %c0_i32 : i32, i32
  }
  func.func @transform_1(%arg0: i32) -> (i32, i32) {
    %c0_i32 = arith.constant 0 : i32
    %c0_i32_0 = arith.constant 0 : i32
    %c0_i32_1 = arith.constant 0 : i32
    return %c0_i32, %c0_i32_0 : i32, i32
  }
  func.func @transform_2(%arg0: i32) -> (i32, i32) {
    %c0_i32 = arith.constant 0 : i32
    %c0_i32_0 = arith.constant 0 : i32
    return %arg0, %c0_i32 : i32, i32
  }
  func.func @transform_3(%arg0: i32) -> (i32, i32) {
    %c0_i32 = arith.constant 0 : i32
    %c0_i32_0 = arith.constant 0 : i32
    return %arg0, %c0_i32 : i32, i32
  }
}

</mosaic_0001>

<llo_original>
// kernel: preact_block_forward.6
$region0: #{preact_block_forward.6}
  #allocation0 [shape = 'u32[]', space=smem, size = 0x4, offset = 0x4, fixed_abs, tag = 'smem constant byte address 0x4 - core index']
  #allocation1 [shape = 'u32[144,128]{1,0:T(1,128)}', space=vmem, size = 0x12000, scoped, tag = 'internal scratch']
  %s0 = inlined_call_operand.vmem [shape: f32[512,128], index: 0, kind: input, shape index: {}]
  %s1 = inlined_call_operand.vmem [shape: f32[1,1,128], index: 1, kind: output, shape index: {0}]
  %s2 = inlined_call_operand.vmem [shape: f32[1,1,128], index: 2, kind: output, shape index: {1}]
  %3 = xla_tuple %s1, %s2
  %s4 = sld [smem:[#allocation0]]
  $region22: #{preact_block_forward.6} parent=0
    _
  %s6 = ssub.s32 1, %s4
  %s7 = scalar_select 0, %s6, %s4
  // Predicated region
  $region2: #{preact_block_forward.6} parent=0 // pred_check
    _
  $region3: #{preact_block_forward.6} parent=0 // pred_check_branch
    %9 = sbr.rel (0) target = $region5
  $region4: #{preact_block_forward.6} parent=0 // pred_region
    _
  $region5: #{preact_block_forward.6} parent=0 // pred_fallthru
    _
  %v10 = vld [vmem:[%s0] sm:$0xff]
  %v11 = vld [vmem:[%s0 + $0x8] sm:$0xff]
  %v12 = vld [vmem:[%s0 + $0x10] sm:$0xff]
  %v13 = vld [vmem:[%s0 + $0x18] sm:$0xff]
  %v14 = vld [vmem:[%s0 + $0x20] sm:$0xff]
  %v15 = vld [vmem:[%s0 + $0x28] sm:$0xff]
  %v16 = vld [vmem:[%s0 + $0x30] sm:$0xff]
  %v17 = vld [vmem:[%s0 + $0x38] sm:$0xff]
  %v18 = vld [vmem:[%s0 + $0x40] sm:$0xff]
  %v19 = vld [vmem:[%s0 + $0x48] sm:$0xff]
  %v20 = vld [vmem:[%s0 + $0x50] sm:$0xff]
  %v21 = vld [vmem:[%s0 + $0x58] sm:$0xff]
  %v22 = vld [vmem:[%s0 + $0x60] sm:$0xff]
  %v23 = vld [vmem:[%s0 + $0x68] sm:$0xff]
  %v24 = vld [vmem:[%s0 + $0x70] sm:$0xff]
  %v25 = vld [vmem:[%s0 + $0x78] sm:$0xff]
  %v26 = vld [vmem:[%s0 + $0x80] sm:$0xff]
  %v27 = vld [vmem:[%s0 + $0x88] sm:$0xff]
  %v28 = vld [vmem:[%s0 + $0x90] sm:$0xff]
  %v29 = vld [vmem:[%s0 + $0x98] sm:$0xff]
  %v30 = vld [vmem:[%s0 + $0xa0] sm:$0xff]
  %v31 = vld [vmem:[%s0 + $0xa8] sm:$0xff]
  %v32 = vld [vmem:[%s0 + $0xb0] sm:$0xff]
  %v33 = vld [vmem:[%s0 + $0xb8] sm:$0xff]
  %v34 = vld [vmem:[%s0 + $0xc0] sm:$0xff]
  %v35 = vld [vmem:[%s0 + $0xc8] sm:$0xff]
  %v36 = vld [vmem:[%s0 + $0xd0] sm:$0xff]
  %v37 = vld [vmem:[%s0 + $0xd8] sm:$0xff]
  %v38 = vld [vmem:[%s0 + $0xe0] sm:$0xff]
  %v39 = vld [vmem:[%s0 + $0xe8] sm:$0xff]
  %v40 = vld [vmem:[%s0 + $0xf0] sm:$0xff]
  %v41 = vld [vmem:[%s0 + $0xf8] sm:$0xff]
  %v42 = vld [vmem:[%s0 + $0x100] sm:$0xff]
  %v43 = vld [vmem:[%s0 + $0x108] sm:$0xff]
  %v44 = vld [vmem:[%s0 + $0x110] sm:$0xff]
  %v45 = vld [vmem:[%s0 + $0x118] sm:$0xff]
  %v46 = vld [vmem:[%s0 + $0x120] sm:$0xff]
  %v47 = vld [vmem:[%s0 + $0x128] sm:$0xff]
  %v48 = vld [vmem:[%s0 + $0x130] sm:$0xff]
  %v49 = vld [vmem:[%s0 + $0x138] sm:$0xff]
  %v50 = vld [vmem:[%s0 + $0x140] sm:$0xff]
  %v51 = vld [vmem:[%s0 + $0x148] sm:$0xff]
  %v52 = vld [vmem:[%s0 + $0x150] sm:$0xff]
  %v53 = vld [vmem:[%s0 + $0x158] sm:$0xff]
  %v54 = vld [vmem:[%s0 + $0x160] sm:$0xff]
  %v55 = vld [vmem:[%s0 + $0x168] sm:$0xff]
  %v56 = vld [vmem:[%s0 + $0x170] sm:$0xff]
  %v57 = vld [vmem:[%s0 + $0x178] sm:$0xff]
  %v58 = vld [vmem:[%s0 + $0x180] sm:$0xff]
  %v59 = vld [vmem:[%s0 + $0x188] sm:$0xff]
  %v60 = vld [vmem:[%s0 + $0x190] sm:$0xff]
  %v61 = vld [vmem:[%s0 + $0x198] sm:$0xff]
  %v62 = vld [vmem:[%s0 + $0x1a0] sm:$0xff]
  %v63 = vld [vmem:[%s0 + $0x1a8] sm:$0xff]
  %v64 = vld [vmem:[%s0 + $0x1b0] sm:$0xff]
  %v65 = vld [vmem:[%s0 + $0x1b8] sm:$0xff]
  %v66 = vld [vmem:[%s0 + $0x1c0] sm:$0xff]
  %v67 = vld [vmem:[%s0 + $0x1c8] sm:$0xff]
  %v68 = vld [vmem:[%s0 + $0x1d0] sm:$0xff]
  %v69 = vld [vmem:[%s0 + $0x1d8] sm:$0xff]
  %v70 = vld [vmem:[%s0 + $0x1e0] sm:$0xff]
  %v71 = vld [vmem:[%s0 + $0x1e8] sm:$0xff]
  %v72 = vld [vmem:[%s0 + $0x1f0] sm:$0xff]
  %v73 = vld [vmem:[%s0 + $0x1f8] sm:$0xff]
  %v74 = vadd.f32 %v10, %v11
  %v75 = vadd.f32 %v74, %v12
  %v76 = vadd.f32 %v75, %v13
  %v77 = vadd.f32 %v76, %v14
  %v78 = vadd.f32 %v77, %v15
  %v79 = vadd.f32 %v78, %v16
  %v80 = vadd.f32 %v79, %v17
  %v81 = vadd.f32 %v80, %v18
  %v82 = vadd.f32 %v81, %v19
  %v83 = vadd.f32 %v82, %v20
  %v84 = vadd.f32 %v83, %v21
  %v85 = vadd.f32 %v84, %v22
  %v86 = vadd.f32 %v85, %v23
  %v87 = vadd.f32 %v86, %v24
  %v88 = vadd.f32 %v87, %v25
  %v89 = vadd.f32 %v88, %v26
  %v90 = vadd.f32 %v89, %v27
  %v91 = vadd.f32 %v90, %v28
  %v92 = vadd.f32 %v91, %v29
  %v93 = vadd.f32 %v92, %v30
  %v94 = vadd.f32 %v93, %v31
  %v95 = vadd.f32 %v94, %v32
  %v96 = vadd.f32 %v95, %v33
  %v97 = vadd.f32 %v96, %v34
  %v98 = vadd.f32 %v97, %v35
  %v99 = vadd.f32 %v98, %v36
  %v100 = vadd.f32 %v99, %v37
  %v101 = vadd.f32 %v100, %v38
  %v102 = vadd.f32 %v101, %v39
  %v103 = vadd.f32 %v102, %v40
  %v104 = vadd.f32 %v103, %v41
  %v105 = vadd.f32 %v104, %v42
  %v106 = vadd.f32 %v105, %v43
  %v107 = vadd.f32 %v106, %v44
  %v108 = vadd.f32 %v107, %v45
  %v109 = vadd.f32 %v108, %v46
  %v110 = vadd.f32 %v109, %v47
  %v111 = vadd.f32 %v110, %v48
  %v112 = vadd.f32 %v111, %v49
  %v113 = vadd.f32 %v112, %v50
  %v114 = vadd.f32 %v113, %v51
  %v115 = vadd.f32 %v114, %v52
  %v116 = vadd.f32 %v115, %v53
  %v117 = vadd.f32 %v116, %v54
  %v118 = vadd.f32 %v117, %v55
  %v119 = vadd.f32 %v118, %v56
  %v120 = vadd.f32 %v119, %v57
  %v121 = vadd.f32 %v120, %v58
  %v122 = vadd.f32 %v121, %v59
  %v123 = vadd.f32 %v122, %v60
  %v124 = vadd.f32 %v123, %v61
  %v125 = vadd.f32 %v124, %v62
  %v126 = vadd.f32 %v125, %v63
  %v127 = vadd.f32 %v126, %v64
  %v128 = vadd.f32 %v127, %v65
  %v129 = vadd.f32 %v128, %v66
  %v130 = vadd.f32 %v129, %v67
  %v131 = vadd.f32 %v130, %v68
  %v132 = vadd.f32 %v131, %v69
  %v133 = vadd.f32 %v132, %v70
  %v134 = vadd.f32 %v133, %v71
  %v135 = vadd.f32 %v134, %v72
  %v136 = vadd.f32 %v135, %v73
  %v137 = vrot.slane %v136, 4
  %v138 = vadd.f32 %v136, %v137
  %v139 = vrot.slane %v138, 2
  %v140 = vadd.f32 %v138, %v139
  %v141 = vrot.slane %v140, 1
  %v142 = vadd.f32 %v140, %v141
  %143 = vst [vmem:[%s1] sm:$0x1] %v142
  %v144 = vmul.f32 %v10, %v10
  %v145 = vmul.f32 %v11, %v11
  %v146 = vmul.f32 %v12, %v12
  %v147 = vmul.f32 %v13, %v13
  %v148 = vmul.f32 %v14, %v14
  %v149 = vmul.f32 %v15, %v15
  %v150 = vmul.f32 %v16, %v16
  %v151 = vmul.f32 %v17, %v17
  %v152 = vmul.f32 %v18, %v18
  %v153 = vmul.f32 %v19, %v19
  %v154 = vmul.f32 %v20, %v20
  %v155 = vmul.f32 %v21, %v21
  %v156 = vmul.f32 %v22, %v22
  %v157 = vmul.f32 %v23, %v23
  %v158 = vmul.f32 %v24, %v24
  %v159 = vmul.f32 %v25, %v25
  %v160 = vmul.f32 %v26, %v26
  %v161 = vmul.f32 %v27, %v27
  %v162 = vmul.f32 %v28, %v28
  %v163 = vmul.f32 %v29, %v29
  %v164 = vmul.f32 %v30, %v30
  %v165 = vmul.f32 %v31, %v31
  %v166 = vmul.f32 %v32, %v32
  %v167 = vmul.f32 %v33, %v33
  %v168 = vmul.f32 %v34, %v34
  %v169 = vmul.f32 %v35, %v35
  %v170 = vmul.f32 %v36, %v36
  %v171 = vmul.f32 %v37, %v37
  %v172 = vmul.f32 %v38, %v38
  %v173 = vmul.f32 %v39, %v39
  %v174 = vmul.f32 %v40, %v40
  %v175 = vmul.f32 %v41, %v41
  %v176 = vmul.f32 %v42, %v42
  %v177 = vmul.f32 %v43, %v43
  %v178 = vmul.f32 %v44, %v44
  %v179 = vmul.f32 %v45, %v45
  %v180 = vmul.f32 %v46, %v46
  %v181 = vmul.f32 %v47, %v47
  %v182 = vmul.f32 %v48, %v48
  %v183 = vmul.f32 %v49, %v49
  %v184 = vmul.f32 %v50, %v50
  %v185 = vmul.f32 %v51, %v51
  %v186 = vmul.f32 %v52, %v52
  %v187 = vmul.f32 %v53, %v53
  %v188 = vmul.f32 %v54, %v54
  %v189 = vmul.f32 %v55, %v55
  %v190 = vmul.f32 %v56, %v56
  %v191 = vmul.f32 %v57, %v57
  %v192 = vmul.f32 %v58, %v58
  %v193 = vmul.f32 %v59, %v59
  %v194 = vmul.f32 %v60, %v60
  %v195 = vmul.f32 %v61, %v61
  %v196 = vmul.f32 %v62, %v62
  %v197 = vmul.f32 %v63, %v63
  %v198 = vmul.f32 %v64, %v64
  %v199 = vmul.f32 %v65, %v65
  %v200 = vmul.f32 %v66, %v66
  %v201 = vmul.f32 %v67, %v67
  %v202 = vmul.f32 %v68, %v68
  %v203 = vmul.f32 %v69, %v69
  %v204 = vmul.f32 %v70, %v70
  %v205 = vmul.f32 %v71, %v71
  %v206 = vmul.f32 %v72, %v72
  %v207 = vmul.f32 %v73, %v73
  %v208 = vadd.f32 %v144, %v145
  %v209 = vadd.f32 %v208, %v146
  %v210 = vadd.f32 %v209, %v147
  %v211 = vadd.f32 %v210, %v148
  %v212 = vadd.f32 %v211, %v149
  %v213 = vadd.f32 %v212, %v150
  %v214 = vadd.f32 %v213, %v151
  %v215 = vadd.f32 %v214, %v152
  %v216 = vadd.f32 %v215, %v153
  %v217 = vadd.f32 %v216, %v154
  %v218 = vadd.f32 %v217, %v155
  %v219 = vadd.f32 %v218, %v156
  %v220 = vadd.f32 %v219, %v157
  %v221 = vadd.f32 %v220, %v158
  %v222 = vadd.f32 %v221, %v159
  %v223 = vadd.f32 %v222, %v160
  %v224 = vadd.f32 %v223, %v161
  %v225 = vadd.f32 %v224, %v162
  %v226 = vadd.f32 %v225, %v163
  %v227 = vadd.f32 %v226, %v164
  %v228 = vadd.f32 %v227, %v165
  %v229 = vadd.f32 %v228, %v166
  %v230 = vadd.f32 %v229, %v167
  %v231 = vadd.f32 %v230, %v168
  %v232 = vadd.f32 %v231, %v169
  %v233 = vadd.f32 %v232, %v170
  %v234 = vadd.f32 %v233, %v171
  %v235 = vadd.f32 %v234, %v172
  %v236 = vadd.f32 %v235, %v173
  %v237 = vadd.f32 %v236, %v174
  %v238 = vadd.f32 %v237, %v175
  %v239 = vadd.f32 %v238, %v176
  %v240 = vadd.f32 %v239, %v177
  %v241 = vadd.f32 %v240, %v178
  %v242 = vadd.f32 %v241, %v179
  %v243 = vadd.f32 %v242, %v180
  %v244 = vadd.f32 %v243, %v181
  %v245 = vadd.f32 %v244, %v182
  %v246 = vadd.f32 %v245, %v183
  %v247 = vadd.f32 %v246, %v184
  %v248 = vadd.f32 %v247, %v185
  %v249 = vadd.f32 %v248, %v186
  %v250 = vadd.f32 %v249, %v187
  %v251 = vadd.f32 %v250, %v188
  %v252 = vadd.f32 %v251, %v189
  %v253 = vadd.f32 %v252, %v190
  %v254 = vadd.f32 %v253, %v191
  %v255 = vadd.f32 %v254, %v192
  %v256 = vadd.f32 %v255, %v193
  %v257 = vadd.f32 %v256, %v194
  %v258 = vadd.f32 %v257, %v195
  %v259 = vadd.f32 %v258, %v196
  %v260 = vadd.f32 %v259, %v197
  %v261 = vadd.f32 %v260, %v198
  %v262 = vadd.f32 %v261, %v199
  %v263 = vadd.f32 %v262, %v200
  %v264 = vadd.f32 %v263, %v201
  %v265 = vadd.f32 %v264, %v202
  %v266 = vadd.f32 %v265, %v203
  %v267 = vadd.f32 %v266, %v204
  %v268 = vadd.f32 %v267, %v205
  %v269 = vadd.f32 %v268, %v206
  %v270 = vadd.f32 %v269, %v207
  %v271 = vrot.slane %v270, 4
  %v272 = vadd.f32 %v270, %v271
  %v273 = vrot.slane %v272, 2
  %v274 = vadd.f32 %v272, %v273
  %v275 = vrot.slane %v274, 1
  %v276 = vadd.f32 %v274, %v275
  %277 = vst [vmem:[%s2] sm:$0x1] %v276
  // Predicated region
  $region6: #{preact_block_forward.6} parent=0 // pred_check
    _
  $region7: #{preact_block_forward.6} parent=0 // pred_check_branch
    %279 = sbr.rel (0) target = $region9
  $region8: #{preact_block_forward.6} parent=0 // pred_region
    _
  $region9: #{preact_block_forward.6} parent=0 // pred_fallthru
    _
  // Predicated region
  $region10: #{preact_block_forward.6} parent=0 // pred_check
    _
  $region11: #{preact_block_forward.6} parent=0 // pred_check_branch
    %281 = sbr.rel (0) target = $region13
  $region12: #{preact_block_forward.6} parent=0 // pred_region
    _
  $region13: #{preact_block_forward.6} parent=0 // pred_fallthru
    _
  // Predicated region
  $region14: #{preact_block_forward.6} parent=0 // pred_check
    _
  $region15: #{preact_block_forward.6} parent=0 // pred_check_branch
    %283 = sbr.rel (0) target = $region17
  $region16: #{preact_block_forward.6} parent=0 // pred_region
    _
  $region17: #{preact_block_forward.6} parent=0 // pred_fallthru
    _
  // Predicated region
  $region18: #{preact_block_forward.6} parent=0 // pred_check
    _
  $region19: #{preact_block_forward.6} parent=0 // pred_check_branch
    %285 = sbr.rel (0) target = $region21
  $region20: #{preact_block_forward.6} parent=0 // pred_region
    _
  $region21: #{preact_block_forward.6} parent=0 // pred_fallthru
    _

// kernel: preact_block_forward.7
$region0: #{preact_block_forward.7}
  #allocation0 [shape = 'u32[]', space=smem, size = 0x4, offset = 0x4, fixed_abs, tag = 'smem constant byte address 0x4 - core index']
  #allocation1 [shape = 'u32[144,128]{1,0:T(1,128)}', space=vmem, size = 0x12000, scoped, tag = 'internal scratch']
  %s0 = inlined_call_operand.vmem [shape: f32[512,128], index: 0, kind: input, shape index: {}]
  %s1 = inlined_call_operand.vmem [shape: f32[1,128], index: 1, kind: input, shape index: {}]
  %s2 = inlined_call_operand.vmem [shape: f32[1,128], index: 2, kind: input, shape index: {}]
  %s3 = inlined_call_operand.vmem [shape: f32[512,128], index: 3, kind: output, shape index: {0}]
  %s4 = inlined_call_operand.vmem [shape: bf16[512,128], index: 4, kind: output, shape index: {1}]
  %5 = xla_tuple %s3, %s4
  %s6 = sld [smem:[#allocation0]]
  $region30: #{preact_block_forward.7} parent=0
    _
  %s8 = ssub.s32 1, %s6
  %s9 = scalar_select 0, %s8, %s6
  // Predicated region
  $region2: #{preact_block_forward.7} parent=0 // pred_check
    _
  $region3: #{preact_block_forward.7} parent=0 // pred_check_branch
    %11 = sbr.rel (0) target = $region5
  $region4: #{preact_block_forward.7} parent=0 // pred_region
    _
  $region5: #{preact_block_forward.7} parent=0 // pred_fallthru
    _
  // Predicated region
  $region6: #{preact_block_forward.7} parent=0 // pred_check
    _
  $region7: #{preact_block_forward.7} parent=0 // pred_check_branch
    %13 = sbr.rel (0) target = $region9
  $region8: #{preact_block_forward.7} parent=0 // pred_region
    _
  $region9: #{preact_block_forward.7} parent=0 // pred_fallthru
    _
  // Predicated region
  $region10: #{preact_block_forward.7} parent=0 // pred_check
    _
  $region11: #{preact_block_forward.7} parent=0 // pred_check_branch
    %15 = sbr.rel (0) target = $region13
  $region12: #{preact_block_forward.7} parent=0 // pred_region
    _
  $region13: #{preact_block_forward.7} parent=0 // pred_fallthru
    _
  %v16 = vld [vmem:[%s0] sm:$0xff]
  %v17 = vld [vmem:[%s0 + $0x8] sm:$0xff]
  %v18 = vld [vmem:[%s0 + $0x10] sm:$0xff]
  %v19 = vld [vmem:[%s0 + $0x18] sm:$0xff]
  %v20 = vld [vmem:[%s0 + $0x20] sm:$0xff]
  %v21 = vld [vmem:[%s0 + $0x28] sm:$0xff]
  %v22 = vld [vmem:[%s0 + $0x30] sm:$0xff]
  %v23 = vld [vmem:[%s0 + $0x38] sm:$0xff]
  %v24 = vld [vmem:[%s0 + $0x40] sm:$0xff]
  %v25 = vld [vmem:[%s0 + $0x48] sm:$0xff]
  %v26 = vld [vmem:[%s0 + $0x50] sm:$0xff]
  %v27 = vld [vmem:[%s0 + $0x58] sm:$0xff]
  %v28 = vld [vmem:[%s0 + $0x60] sm:$0xff]
  %v29 = vld [vmem:[%s0 + $0x68] sm:$0xff]
  %v30 = vld [vmem:[%s0 + $0x70] sm:$0xff]
  %v31 = vld [vmem:[%s0 + $0x78] sm:$0xff]
  %v32 = vld [vmem:[%s0 + $0x80] sm:$0xff]
  %v33 = vld [vmem:[%s0 + $0x88] sm:$0xff]
  %v34 = vld [vmem:[%s0 + $0x90] sm:$0xff]
  %v35 = vld [vmem:[%s0 + $0x98] sm:$0xff]
  %v36 = vld [vmem:[%s0 + $0xa0] sm:$0xff]
  %v37 = vld [vmem:[%s0 + $0xa8] sm:$0xff]
  %v38 = vld [vmem:[%s0 + $0xb0] sm:$0xff]
  %v39 = vld [vmem:[%s0 + $0xb8] sm:$0xff]
  %v40 = vld [vmem:[%s0 + $0xc0] sm:$0xff]
  %v41 = vld [vmem:[%s0 + $0xc8] sm:$0xff]
  %v42 = vld [vmem:[%s0 + $0xd0] sm:$0xff]
  %v43 = vld [vmem:[%s0 + $0xd8] sm:$0xff]
  %v44 = vld [vmem:[%s0 + $0xe0] sm:$0xff]
  %v45 = vld [vmem:[%s0 + $0xe8] sm:$0xff]
  %v46 = vld [vmem:[%s0 + $0xf0] sm:$0xff]
  %v47 = vld [vmem:[%s0 + $0xf8] sm:$0xff]
  %v48 = vld [vmem:[%s0 + $0x100] sm:$0xff]
  %v49 = vld [vmem:[%s0 + $0x108] sm:$0xff]
  %v50 = vld [vmem:[%s0 + $0x110] sm:$0xff]
  %v51 = vld [vmem:[%s0 + $0x118] sm:$0xff]
  %v52 = vld [vmem:[%s0 + $0x120] sm:$0xff]
  %v53 = vld [vmem:[%s0 + $0x128] sm:$0xff]
  %v54 = vld [vmem:[%s0 + $0x130] sm:$0xff]
  %v55 = vld [vmem:[%s0 + $0x138] sm:$0xff]
  %v56 = vld [vmem:[%s0 + $0x140] sm:$0xff]
  %v57 = vld [vmem:[%s0 + $0x148] sm:$0xff]
  %v58 = vld [vmem:[%s0 + $0x150] sm:$0xff]
  %v59 = vld [vmem:[%s0 + $0x158] sm:$0xff]
  %v60 = vld [vmem:[%s0 + $0x160] sm:$0xff]
  %v61 = vld [vmem:[%s0 + $0x168] sm:$0xff]
  %v62 = vld [vmem:[%s0 + $0x170] sm:$0xff]
  %v63 = vld [vmem:[%s0 + $0x178] sm:$0xff]
  %v64 = vld [vmem:[%s0 + $0x180] sm:$0xff]
  %v65 = vld [vmem:[%s0 + $0x188] sm:$0xff]
  %v66 = vld [vmem:[%s0 + $0x190] sm:$0xff]
  %v67 = vld [vmem:[%s0 + $0x198] sm:$0xff]
  %v68 = vld [vmem:[%s0 + $0x1a0] sm:$0xff]
  %v69 = vld [vmem:[%s0 + $0x1a8] sm:$0xff]
  %v70 = vld [vmem:[%s0 + $0x1b0] sm:$0xff]
  %v71 = vld [vmem:[%s0 + $0x1b8] sm:$0xff]
  %v72 = vld [vmem:[%s0 + $0x1c0] sm:$0xff]
  %v73 = vld [vmem:[%s0 + $0x1c8] sm:$0xff]
  %v74 = vld [vmem:[%s0 + $0x1d0] sm:$0xff]
  %v75 = vld [vmem:[%s0 + $0x1d8] sm:$0xff]
  %v76 = vld [vmem:[%s0 + $0x1e0] sm:$0xff]
  %v77 = vld [vmem:[%s0 + $0x1e8] sm:$0xff]
  %v78 = vld [vmem:[%s0 + $0x1f0] sm:$0xff]
  %v79 = vld [vmem:[%s0 + $0x1f8] sm:$0xff]
  %v80 = vld [vmem:[%s1] sm:$0x1]
  %v82 = vlaneseq
  %v83 = vshrl.u32 %v82, 7
  %v84 = vsub.s32 0, %v83
  %v85 = vrot.slane %v80, %v84
  %v87 = vmul.f32 %v16, %v85
  %v88 = vmul.f32 %v17, %v85
  %v89 = vmul.f32 %v18, %v85
  %v90 = vmul.f32 %v19, %v85
  %v91 = vmul.f32 %v20, %v85
  %v92 = vmul.f32 %v21, %v85
  %v93 = vmul.f32 %v22, %v85
  %v94 = vmul.f32 %v23, %v85
  %v95 = vmul.f32 %v24, %v85
  %v96 = vmul.f32 %v25, %v85
  %v97 = vmul.f32 %v26, %v85
  %v98 = vmul.f32 %v27, %v85
  %v99 = vmul.f32 %v28, %v85
  %v100 = vmul.f32 %v29, %v85
  %v101 = vmul.f32 %v30, %v85
  %v102 = vmul.f32 %v31, %v85
  %v103 = vmul.f32 %v32, %v85
  %v104 = vmul.f32 %v33, %v85
  %v105 = vmul.f32 %v34, %v85
  %v106 = vmul.f32 %v35, %v85
  %v107 = vmul.f32 %v36, %v85
  %v108 = vmul.f32 %v37, %v85
  %v109 = vmul.f32 %v38, %v85
  %v110 = vmul.f32 %v39, %v85
  %v111 = vmul.f32 %v40, %v85
  %v112 = vmul.f32 %v41, %v85
  %v113 = vmul.f32 %v42, %v85
  %v114 = vmul.f32 %v43, %v85
  %v115 = vmul.f32 %v44, %v85
  %v116 = vmul.f32 %v45, %v85
  %v117 = vmul.f32 %v46, %v85
  %v118 = vmul.f32 %v47, %v85
  %v119 = vmul.f32 %v48, %v85
  %v120 = vmul.f32 %v49, %v85
  %v121 = vmul.f32 %v50, %v85
  %v122 = vmul.f32 %v51, %v85
  %v123 = vmul.f32 %v52, %v85
  %v124 = vmul.f32 %v53, %v85
  %v125 = vmul.f32 %v54, %v85
  %v126 = vmul.f32 %v55, %v85
  %v127 = vmul.f32 %v56, %v85
  %v128 = vmul.f32 %v57, %v85
  %v129 = vmul.f32 %v58, %v85
  %v130 = vmul.f32 %v59, %v85
  %v131 = vmul.f32 %v60, %v85
  %v132 = vmul.f32 %v61, %v85
  %v133 = vmul.f32 %v62, %v85
  %v134 = vmul.f32 %v63, %v85
  %v135 = vmul.f32 %v64, %v85
  %v136 = vmul.f32 %v65, %v85
  %v137 = vmul.f32 %v66, %v85
  %v138 = vmul.f32 %v67, %v85
  %v139 = vmul.f32 %v68, %v85
  %v140 = vmul.f32 %v69, %v85
  %v141 = vmul.f32 %v70, %v85
  %v142 = vmul.f32 %v71, %v85
  %v143 = vmul.f32 %v72, %v85
  %v144 = vmul.f32 %v73, %v85
  %v145 = vmul.f32 %v74, %v85
  %v146 = vmul.f32 %v75, %v85
  %v147 = vmul.f32 %v76, %v85
  %v148 = vmul.f32 %v77, %v85
  %v149 = vmul.f32 %v78, %v85
  %v150 = vmul.f32 %v79, %v85
  %v151 = vld [vmem:[%s2] sm:$0x1]
  %v153 = vlaneseq
  %v154 = vshrl.u32 %v153, 7
  %v155 = vsub.s32 0, %v154
  %v156 = vrot.slane %v151, %v155
  %v158 = vadd.f32 %v87, %v156
  %v159 = vadd.f32 %v88, %v156
  %v160 = vadd.f32 %v89, %v156
  %v161 = vadd.f32 %v90, %v156
  %v162 = vadd.f32 %v91, %v156
  %v163 = vadd.f32 %v92, %v156
  %v164 = vadd.f32 %v93, %v156
  %v165 = vadd.f32 %v94, %v156
  %v166 = vadd.f32 %v95, %v156
  %v167 = vadd.f32 %v96, %v156
  %v168 = vadd.f32 %v97, %v156
  %v169 = vadd.f32 %v98, %v156
  %v170 = vadd.f32 %v99, %v156
  %v171 = vadd.f32 %v100, %v156
  %v172 = vadd.f32 %v101, %v156
  %v173 = vadd.f32 %v102, %v156
  %v174 = vadd.f32 %v103, %v156
  %v175 = vadd.f32 %v104, %v156
  %v176 = vadd.f32 %v105, %v156
  %v177 = vadd.f32 %v106, %v156
  %v178 = vadd.f32 %v107, %v156
  %v179 = vadd.f32 %v108, %v156
  %v180 = vadd.f32 %v109, %v156
  %v181 = vadd.f32 %v110, %v156
  %v182 = vadd.f32 %v111, %v156
  %v183 = vadd.f32 %v112, %v156
  %v184 = vadd.f32 %v113, %v156
  %v185 = vadd.f32 %v114, %v156
  %v186 = vadd.f32 %v115, %v156
  %v187 = vadd.f32 %v116, %v156
  %v188 = vadd.f32 %v117, %v156
  %v189 = vadd.f32 %v118, %v156
  %v190 = vadd.f32 %v119, %v156
  %v191 = vadd.f32 %v120, %v156
  %v192 = vadd.f32 %v121, %v156
  %v193 = vadd.f32 %v122, %v156
  %v194 = vadd.f32 %v123, %v156
  %v195 = vadd.f32 %v124, %v156
  %v196 = vadd.f32 %v125, %v156
  %v197 = vadd.f32 %v126, %v156
  %v198 = vadd.f32 %v127, %v156
  %v199 = vadd.f32 %v128, %v156
  %v200 = vadd.f32 %v129, %v156
  %v201 = vadd.f32 %v130, %v156
  %v202 = vadd.f32 %v131, %v156
  %v203 = vadd.f32 %v132, %v156
  %v204 = vadd.f32 %v133, %v156
  %v205 = vadd.f32 %v134, %v156
  %v206 = vadd.f32 %v135, %v156
  %v207 = vadd.f32 %v136, %v156
  %v208 = vadd.f32 %v137, %v156
  %v209 = vadd.f32 %v138, %v156
  %v210 = vadd.f32 %v139, %v156
  %v211 = vadd.f32 %v140, %v156
  %v212 = vadd.f32 %v141, %v156
  %v213 = vadd.f32 %v142, %v156
  %v214 = vadd.f32 %v143, %v156
  %v215 = vadd.f32 %v144, %v156
  %v216 = vadd.f32 %v145, %v156
  %v217 = vadd.f32 %v146, %v156
  %v218 = vadd.f32 %v147, %v156
  %v219 = vadd.f32 %v148, %v156
  %v220 = vadd.f32 %v149, %v156
  %v221 = vadd.f32 %v150, %v156
  %v222 = vmax.f32 %v158, 0.0
  %v223 = vmax.f32 %v159, 0.0
  %v224 = vmax.f32 %v160, 0.0
  %v225 = vmax.f32 %v161, 0.0
  %v226 = vmax.f32 %v162, 0.0
  %v227 = vmax.f32 %v163, 0.0
  %v228 = vmax.f32 %v164, 0.0
  %v229 = vmax.f32 %v165, 0.0
  %v230 = vmax.f32 %v166, 0.0
  %v231 = vmax.f32 %v167, 0.0
  %v232 = vmax.f32 %v168, 0.0
  %v233 = vmax.f32 %v169, 0.0
  %v234 = vmax.f32 %v170, 0.0
  %v235 = vmax.f32 %v171, 0.0
  %v236 = vmax.f32 %v172, 0.0
  %v237 = vmax.f32 %v173, 0.0
  %v238 = vmax.f32 %v174, 0.0
  %v239 = vmax.f32 %v175, 0.0
  %v240 = vmax.f32 %v176, 0.0
  %v241 = vmax.f32 %v177, 0.0
  %v242 = vmax.f32 %v178, 0.0
  %v243 = vmax.f32 %v179, 0.0
  %v244 = vmax.f32 %v180, 0.0
  %v245 = vmax.f32 %v181, 0.0
  %v246 = vmax.f32 %v182, 0.0
  %v247 = vmax.f32 %v183, 0.0
  %v248 = vmax.f32 %v184, 0.0
  %v249 = vmax.f32 %v185, 0.0
  %v250 = vmax.f32 %v186, 0.0
  %v251 = vmax.f32 %v187, 0.0
  %v252 = vmax.f32 %v188, 0.0
  %v253 = vmax.f32 %v189, 0.0
  %v254 = vmax.f32 %v190, 0.0
  %v255 = vmax.f32 %v191, 0.0
  %v256 = vmax.f32 %v192, 0.0
  %v257 = vmax.f32 %v193, 0.0
  %v258 = vmax.f32 %v194, 0.0
  %v259 = vmax.f32 %v195, 0.0
  %v260 = vmax.f32 %v196, 0.0
  %v261 = vmax.f32 %v197, 0.0
  %v262 = vmax.f32 %v198, 0.0
  %v263 = vmax.f32 %v199, 0.0
  %v264 = vmax.f32 %v200, 0.0
  %v265 = vmax.f32 %v201, 0.0
  %v266 = vmax.f32 %v202, 0.0
  %v267 = vmax.f32 %v203, 0.0
  %v268 = vmax.f32 %v204, 0.0
  %v269 = vmax.f32 %v205, 0.0
  %v270 = vmax.f32 %v206, 0.0
  %v271 = vmax.f32 %v207, 0.0
  %v272 = vmax.f32 %v208, 0.0
  %v273 = vmax.f32 %v209, 0.0
  %v274 = vmax.f32 %v210, 0.0
  %v275 = vmax.f32 %v211, 0.0
  %v276 = vmax.f32 %v212, 0.0
  %v277 = vmax.f32 %v213, 0.0
  %v278 = vmax.f32 %v214, 0.0
  %v279 = vmax.f32 %v215, 0.0
  %v280 = vmax.f32 %v216, 0.0
  %v281 = vmax.f32 %v217, 0.0
  %v282 = vmax.f32 %v218, 0.0
  %v283 = vmax.f32 %v219, 0.0
  %v284 = vmax.f32 %v220, 0.0
  %v285 = vmax.f32 %v221, 0.0
  %286 = vst [vmem:[%s3] sm:$0xff] %v222
  %287 = vst [vmem:[%s3 + $0x8] sm:$0xff] %v223
  %288 = vst [vmem:[%s3 + $0x10] sm:$0xff] %v224
  %289 = vst [vmem:[%s3 + $0x18] sm:$0xff] %v225
  %290 = vst [vmem:[%s3 + $0x20] sm:$0xff] %v226
  %291 = vst [vmem:[%s3 + $0x28] sm:$0xff] %v227
  %292 = vst [vmem:[%s3 + $0x30] sm:$0xff] %v228
  %293 = vst [vmem:[%s3 + $0x38] sm:$0xff] %v229
  %294 = vst [vmem:[%s3 + $0x40] sm:$0xff] %v230
  %295 = vst [vmem:[%s3 + $0x48] sm:$0xff] %v231
  %296 = vst [vmem:[%s3 + $0x50] sm:$0xff] %v232
  %297 = vst [vmem:[%s3 + $0x58] sm:$0xff] %v233
  %298 = vst [vmem:[%s3 + $0x60] sm:$0xff] %v234
  %299 = vst [vmem:[%s3 + $0x68] sm:$0xff] %v235
  %300 = vst [vmem:[%s3 + $0x70] sm:$0xff] %v236
  %301 = vst [vmem:[%s3 + $0x78] sm:$0xff] %v237
  %302 = vst [vmem:[%s3 + $0x80] sm:$0xff] %v238
  %303 = vst [vmem:[%s3 + $0x88] sm:$0xff] %v239
  %304 = vst [vmem:[%s3 + $0x90] sm:$0xff] %v240
  %305 = vst [vmem:[%s3 + $0x98] sm:$0xff] %v241
  %306 = vst [vmem:[%s3 + $0xa0] sm:$0xff] %v242
  %307 = vst [vmem:[%s3 + $0xa8] sm:$0xff] %v243
  %308 = vst [vmem:[%s3 + $0xb0] sm:$0xff] %v244
  %309 = vst [vmem:[%s3 + $0xb8] sm:$0xff] %v245
  %310 = vst [vmem:[%s3 + $0xc0] sm:$0xff] %v246
  %311 = vst [vmem:[%s3 + $0xc8] sm:$0xff] %v247
  %312 = vst [vmem:[%s3 + $0xd0] sm:$0xff] %v248
  %313 = vst [vmem:[%s3 + $0xd8] sm:$0xff] %v249
  %314 = vst [vmem:[%s3 + $0xe0] sm:$0xff] %v250
  %315 = vst [vmem:[%s3 + $0xe8] sm:$0xff] %v251
  %316 = vst [vmem:[%s3 + $0xf0] sm:$0xff] %v252
  %317 = vst [vmem:[%s3 + $0xf8] sm:$0xff] %v253
  %318 = vst [vmem:[%s3 + $0x100] sm:$0xff] %v254
  %319 = vst [vmem:[%s3 + $0x108] sm:$0xff] %v255
  %320 = vst [vmem:[%s3 + $0x110] sm:$0xff] %v256
  %321 = vst [vmem:[%s3 + $0x118] sm:$0xff] %v257
  %322 = vst [vmem:[%s3 + $0x120] sm:$0xff] %v258
  %323 = vst [vmem:[%s3 + $0x128] sm:$0xff] %v259
  %324 = vst [vmem:[%s3 + $0x130] sm:$0xff] %v260
  %325 = vst [vmem:[%s3 + $0x138] sm:$0xff] %v261
  %326 = vst [vmem:[%s3 + $0x140] sm:$0xff] %v262
  %327 = vst [vmem:[%s3 + $0x148] sm:$0xff] %v263
  %328 = vst [vmem:[%s3 + $0x150] sm:$0xff] %v264
  %329 = vst [vmem:[%s3 + $0x158] sm:$0xff] %v265
  %330 = vst [vmem:[%s3 + $0x160] sm:$0xff] %v266
  %331 = vst [vmem:[%s3 + $0x168] sm:$0xff] %v267
  %332 = vst [vmem:[%s3 + $0x170] sm:$0xff] %v268
  %333 = vst [vmem:[%s3 + $0x178] sm:$0xff] %v269
  %334 = vst [vmem:[%s3 + $0x180] sm:$0xff] %v270
  %335 = vst [vmem:[%s3 + $0x188] sm:$0xff] %v271
  %336 = vst [vmem:[%s3 + $0x190] sm:$0xff] %v272
  %337 = vst [vmem:[%s3 + $0x198] sm:$0xff] %v273
  %338 = vst [vmem:[%s3 + $0x1a0] sm:$0xff] %v274
  %339 = vst [vmem:[%s3 + $0x1a8] sm:$0xff] %v275
  %340 = vst [vmem:[%s3 + $0x1b0] sm:$0xff] %v276
  %341 = vst [vmem:[%s3 + $0x1b8] sm:$0xff] %v277
  %342 = vst [vmem:[%s3 + $0x1c0] sm:$0xff] %v278
  %343 = vst [vmem:[%s3 + $0x1c8] sm:$0xff] %v279
  %344 = vst [vmem:[%s3 + $0x1d0] sm:$0xff] %v280
  %345 = vst [vmem:[%s3 + $0x1d8] sm:$0xff] %v281
  %346 = vst [vmem:[%s3 + $0x1e0] sm:$0xff] %v282
  %347 = vst [vmem:[%s3 + $0x1e8] sm:$0xff] %v283
  %348 = vst [vmem:[%s3 + $0x1f0] sm:$0xff] %v284
  %349 = vst [vmem:[%s3 + $0x1f8] sm:$0xff] %v285
  %v350 = vpack.c.bf16 %v223, %v222
  %v351 = vpack.c.bf16 %v225, %v224
  %v352 = vpack.c.bf16 %v227, %v226
  %v353 = vpack.c.bf16 %v229, %v228
  %v354 = vpack.c.bf16 %v231, %v230
  %v355 = vpack.c.bf16 %v233, %v232
  %v356 = vpack.c.bf16 %v235, %v234
  %v357 = vpack.c.bf16 %v237, %v236
  %v358 = vpack.c.bf16 %v239, %v238
  %v359 = vpack.c.bf16 %v241, %v240
  %v360 = vpack.c.bf16 %v243, %v242
  %v361 = vpack.c.bf16 %v245, %v244
  %v362 = vpack.c.bf16 %v247, %v246
  %v363 = vpack.c.bf16 %v249, %v248
  %v364 = vpack.c.bf16 %v251, %v250
  %v365 = vpack.c.bf16 %v253, %v252
  %v366 = vpack.c.bf16 %v255, %v254
  %v367 = vpack.c.bf16 %v257, %v256
  %v368 = vpack.c.bf16 %v259, %v258
  %v369 = vpack.c.bf16 %v261, %v260
  %v370 = vpack.c.bf16 %v263, %v262
  %v371 = vpack.c.bf16 %v265, %v264
  %v372 = vpack.c.bf16 %v267, %v266
  %v373 = vpack.c.bf16 %v269, %v268
  %v374 = vpack.c.bf16 %v271, %v270
  %v375 = vpack.c.bf16 %v273, %v272
  %v376 = vpack.c.bf16 %v275, %v274
  %v377 = vpack.c.bf16 %v277, %v276
  %v378 = vpack.c.bf16 %v279, %v278
  %v379 = vpack.c.bf16 %v281, %v280
  %v380 = vpack.c.bf16 %v283, %v282
  %v381 = vpack.c.bf16 %v285, %v284
  %v414 = vunpack.c.l.b16 %v350
  %v415 = vunpack.c.h.b16 %v350
  %v416 = vunpack.c.l.b16 %v351
  %v417 = vunpack.c.h.b16 %v351
  %v418 = vunpack.c.l.b16 %v352
  %v419 = vunpack.c.h.b16 %v352
  %v420 = vunpack.c.l.b16 %v353
  %v421 = vunpack.c.h.b16 %v353
  %v422 = vunpack.c.l.b16 %v354
  %v423 = vunpack.c.h.b16 %v354
  %v424 = vunpack.c.l.b16 %v355
  %v425 = vunpack.c.h.b16 %v355
  %v426 = vunpack.c.l.b16 %v356
  %v427 = vunpack.c.h.b16 %v356
  %v428 = vunpack.c.l.b16 %v357
  %v429 = vunpack.c.h.b16 %v357
  %v430 = vunpack.c.l.b16 %v358
  %v431 = vunpack.c.h.b16 %v358
  %v432 = vunpack.c.l.b16 %v359
  %v433 = vunpack.c.h.b16 %v359
  %v434 = vunpack.c.l.b16 %v360
  %v435 = vunpack.c.h.b16 %v360
  %v436 = vunpack.c.l.b16 %v361
  %v437 = vunpack.c.h.b16 %v361
  %v438 = vunpack.c.l.b16 %v362
  %v439 = vunpack.c.h.b16 %v362
  %v440 = vunpack.c.l.b16 %v363
  %v441 = vunpack.c.h.b16 %v363
  %v442 = vunpack.c.l.b16 %v364
  %v443 = vunpack.c.h.b16 %v364
  %v444 = vunpack.c.l.b16 %v365
  %v445 = vunpack.c.h.b16 %v365
  %v446 = vunpack.c.l.b16 %v366
  %v447 = vunpack.c.h.b16 %v366
  %v448 = vunpack.c.l.b16 %v367
  %v449 = vunpack.c.h.b16 %v367
  %v450 = vunpack.c.l.b16 %v368
  %v451 = vunpack.c.h.b16 %v368
  %v452 = vunpack.c.l.b16 %v369
  %v453 = vunpack.c.h.b16 %v369
  %v454 = vunpack.c.l.b16 %v370
  %v455 = vunpack.c.h.b16 %v370
  %v456 = vunpack.c.l.b16 %v371
  %v457 = vunpack.c.h.b16 %v371
  %v458 = vunpack.c.l.b16 %v372
  %v459 = vunpack.c.h.b16 %v372
  %v460 = vunpack.c.l.b16 %v373
  %v461 = vunpack.c.h.b16 %v373
  %v462 = vunpack.c.l.b16 %v374
  %v463 = vunpack.c.h.b16 %v374
  %v464 = vunpack.c.l.b16 %v375
  %v465 = vunpack.c.h.b16 %v375
  %v466 = vunpack.c.l.b16 %v376
  %v467 = vunpack.c.h.b16 %v376
  %v468 = vunpack.c.l.b16 %v377
  %v469 = vunpack.c.h.b16 %v377
  %v470 = vunpack.c.l.b16 %v378
  %v471 = vunpack.c.h.b16 %v378
  %v472 = vunpack.c.l.b16 %v379
  %v473 = vunpack.c.h.b16 %v379
  %v474 = vunpack.c.l.b16 %v380
  %v475 = vunpack.c.h.b16 %v380
  %v476 = vunpack.c.l.b16 %v381
  %v477 = vunpack.c.h.b16 %v381
  %v478 = vpack.c.b16 %v414, %v414
  %v479 = vpack.c.b16 %v415, %v415
  %v480 = vpack.c.b16 %v416, %v416
  %v481 = vpack.c.b16 %v417, %v417
  %v482 = vpack.c.b16 %v418, %v418
  %v483 = vpack.c.b16 %v419, %v419
  %v484 = vpack.c.b16 %v420, %v420
  %v485 = vpack.c.b16 %v421, %v421
  %v486 = vpack.c.b16 %v422, %v422
  %v487 = vpack.c.b16 %v423, %v423
  %v488 = vpack.c.b16 %v424, %v424
  %v489 = vpack.c.b16 %v425, %v425
  %v490 = vpack.c.b16 %v426, %v426
  %v491 = vpack.c.b16 %v427, %v427
  %v492 = vpack.c.b16 %v428, %v428
  %v493 = vpack.c.b16 %v429, %v429
  %v494 = vpack.c.b16 %v430, %v430
  %v495 = vpack.c.b16 %v431, %v431
  %v496 = vpack.c.b16 %v432, %v432
  %v497 = vpack.c.b16 %v433, %v433
  %v498 = vpack.c.b16 %v434, %v434
  %v499 = vpack.c.b16 %v435, %v435
  %v500 = vpack.c.b16 %v436, %v436
  %v501 = vpack.c.b16 %v437, %v437
  %v502 = vpack.c.b16 %v438, %v438
  %v503 = vpack.c.b16 %v439, %v439
  %v504 = vpack.c.b16 %v440, %v440
  %v505 = vpack.c.b16 %v441, %v441
  %v506 = vpack.c.b16 %v442, %v442
  %v507 = vpack.c.b16 %v443, %v443
  %v508 = vpack.c.b16 %v444, %v444
  %v509 = vpack.c.b16 %v445, %v445
  %v510 = vpack.c.b16 %v446, %v446
  %v511 = vpack.c.b16 %v447, %v447
  %v512 = vpack.c.b16 %v448, %v448
  %v513 = vpack.c.b16 %v449, %v449
  %v514 = vpack.c.b16 %v450, %v450
  %v515 = vpack.c.b16 %v451, %v451
  %v516 = vpack.c.b16 %v452, %v452
  %v517 = vpack.c.b16 %v453, %v453
  %v518 = vpack.c.b16 %v454, %v454
  %v519 = vpack.c.b16 %v455, %v455
  %v520 = vpack.c.b16 %v456, %v456
  %v521 = vpack.c.b16 %v457, %v457
  %v522 = vpack.c.b16 %v458, %v458
  %v523 = vpack.c.b16 %v459, %v459
  %v524 = vpack.c.b16 %v460, %v460
  %v525 = vpack.c.b16 %v461, %v461
  %v526 = vpack.c.b16 %v462, %v462
  %v527 = vpack.c.b16 %v463, %v463
  %v528 = vpack.c.b16 %v464, %v464
  %v529 = vpack.c.b16 %v465, %v465
  %v530 = vpack.c.b16 %v466, %v466
  %v531 = vpack.c.b16 %v467, %v467
  %v532 = vpack.c.b16 %v468, %v468
  %v533 = vpack.c.b16 %v469, %v469
  %v534 = vpack.c.b16 %v470, %v470
  %v535 = vpack.c.b16 %v471, %v471
  %v536 = vpack.c.b16 %v472, %v472
  %v537 = vpack.c.b16 %v473, %v473
  %v538 = vpack.c.b16 %v474, %v474
  %v539 = vpack.c.b16 %v475, %v475
  %v540 = vpack.c.b16 %v476, %v476
  %v541 = vpack.c.b16 %v477, %v477
  %606 = vst [vmem:[%s4] sm:$0xf] %v478
  %607 = vst [vmem:[%s4 + $0x4] sm:$0xf] %v479
  %608 = vst [vmem:[%s4 + $0x8] sm:$0xf] %v480
  %609 = vst [vmem:[%s4 + $0xc] sm:$0xf] %v481
  %610 = vst [vmem:[%s4 + $0x10] sm:$0xf] %v482
  %611 = vst [vmem:[%s4 + $0x14] sm:$0xf] %v483
  %612 = vst [vmem:[%s4 + $0x18] sm:$0xf] %v484
  %613 = vst [vmem:[%s4 + $0x1c] sm:$0xf] %v485
  %614 = vst [vmem:[%s4 + $0x20] sm:$0xf] %v486
  %615 = vst [vmem:[%s4 + $0x24] sm:$0xf] %v487
  %616 = vst [vmem:[%s4 + $0x28] sm:$0xf] %v488
  %617 = vst [vmem:[%s4 + $0x2c] sm:$0xf] %v489
  %618 = vst [vmem:[%s4 + $0x30] sm:$0xf] %v490
  %619 = vst [vmem:[%s4 + $0x34] sm:$0xf] %v491
  %620 = vst [vmem:[%s4 + $0x38] sm:$0xf] %v492
  %621 = vst [vmem:[%s4 + $0x3c] sm:$0xf] %v493
  %622 = vst [vmem:[%s4 + $0x40] sm:$0xf] %v494
  %623 = vst [vmem:[%s4 + $0x44] sm:$0xf] %v495
  %624 = vst [vmem:[%s4 + $0x48] sm:$0xf] %v496
  %625 = vst [vmem:[%s4 + $0x4c] sm:$0xf] %v497
  %626 = vst [vmem:[%s4 + $0x50] sm:$0xf] %v498
  %627 = vst [vmem:[%s4 + $0x54] sm:$0xf] %v499
  %628 = vst [vmem:[%s4 + $0x58] sm:$0xf] %v500
  %629 = vst [vmem:[%s4 + $0x5c] sm:$0xf] %v501
  %630 = vst [vmem:[%s4 + $0x60] sm:$0xf] %v502
  %631 = vst [vmem:[%s4 + $0x64] sm:$0xf] %v503
  %632 = vst [vmem:[%s4 + $0x68] sm:$0xf] %v504
  %633 = vst [vmem:[%s4 + $0x6c] sm:$0xf] %v505
  %634 = vst [vmem:[%s4 + $0x70] sm:$0xf] %v506
  %635 = vst [vmem:[%s4 + $0x74] sm:$0xf] %v507
  %636 = vst [vmem:[%s4 + $0x78] sm:$0xf] %v508
  %637 = vst [vmem:[%s4 + $0x7c] sm:$0xf] %v509
  %638 = vst [vmem:[%s4 + $0x80] sm:$0xf] %v510
  %639 = vst [vmem:[%s4 + $0x84] sm:$0xf] %v511
  %640 = vst [vmem:[%s4 + $0x88] sm:$0xf] %v512
  %641 = vst [vmem:[%s4 + $0x8c] sm:$0xf] %v513
  %642 = vst [vmem:[%s4 + $0x90] sm:$0xf] %v514
  %643 = vst [vmem:[%s4 + $0x94] sm:$0xf] %v515
  %644 = vst [vmem:[%s4 + $0x98] sm:$0xf] %v516
  %645 = vst [vmem:[%s4 + $0x9c] sm:$0xf] %v517
  %646 = vst [vmem:[%s4 + $0xa0] sm:$0xf] %v518
  %647 = vst [vmem:[%s4 + $0xa4] sm:$0xf] %v519
  %648 = vst [vmem:[%s4 + $0xa8] sm:$0xf] %v520
  %649 = vst [vmem:[%s4 + $0xac] sm:$0xf] %v521
  %650 = vst [vmem:[%s4 + $0xb0] sm:$0xf] %v522
  %651 = vst [vmem:[%s4 + $0xb4] sm:$0xf] %v523
  %652 = vst [vmem:[%s4 + $0xb8] sm:$0xf] %v524
  %653 = vst [vmem:[%s4 + $0xbc] sm:$0xf] %v525
  %654 = vst [vmem:[%s4 + $0xc0] sm:$0xf] %v526
  %655 = vst [vmem:[%s4 + $0xc4] sm:$0xf] %v527
  %656 = vst [vmem:[%s4 + $0xc8] sm:$0xf] %v528
  %657 = vst [vmem:[%s4 + $0xcc] sm:$0xf] %v529
  %658 = vst [vmem:[%s4 + $0xd0] sm:$0xf] %v530
  %659 = vst [vmem:[%s4 + $0xd4] sm:$0xf] %v531
  %660 = vst [vmem:[%s4 + $0xd8] sm:$0xf] %v532
  %661 = vst [vmem:[%s4 + $0xdc] sm:$0xf] %v533
  %662 = vst [vmem:[%s4 + $0xe0] sm:$0xf] %v534
  %663 = vst [vmem:[%s4 + $0xe4] sm:$0xf] %v535
  %664 = vst [vmem:[%s4 + $0xe8] sm:$0xf] %v536
  %665 = vst [vmem:[%s4 + $0xec] sm:$0xf] %v537
  %666 = vst [vmem:[%s4 + $0xf0] sm:$0xf] %v538
  %667 = vst [vmem:[%s4 + $0xf4] sm:$0xf] %v539
  %668 = vst [vmem:[%s4 + $0xf8] sm:$0xf] %v540
  %669 = vst [vmem:[%s4 + $0xfc] sm:$0xf] %v541
  // Predicated region
  $region14: #{preact_block_forward.7} parent=0 // pred_check
    _
  $region15: #{preact_block_forward.7} parent=0 // pred_check_branch
    %671 = sbr.rel (0) target = $region17
  $region16: #{preact_block_forward.7} parent=0 // pred_region
    _
  $region17: #{preact_block_forward.7} parent=0 // pred_fallthru
    _
  // Predicated region
  $region18: #{preact_block_forward.7} parent=0 // pred_check
    _
  $region19: #{preact_block_forward.7} parent=0 // pred_check_branch
    %673 = sbr.rel (0) target = $region21
  $region20: #{preact_block_forward.7} parent=0 // pred_region
    _
  $region21: #{preact_block_forward.7} parent=0 // pred_fallthru
    _
  // Predicated region
  $region22: #{preact_block_forward.7} parent=0 // pred_check
    _
  $region23: #{preact_block_forward.7} parent=0 // pred_check_branch
    %675 = sbr.rel (0) target = $region25
  $region24: #{preact_block_forward.7} parent=0 // pred_region
    _
  $region25: #{preact_block_forward.7} parent=0 // pred_fallthru
    _
  // Predicated region
  $region26: #{preact_block_forward.7} parent=0 // pred_check
    _
  $region27: #{preact_block_forward.7} parent=0 // pred_check_branch
    %677 = sbr.rel (0) target = $region29
  $region28: #{preact_block_forward.7} parent=0 // pred_region
    _
  $region29: #{preact_block_forward.7} parent=0 // pred_fallthru
    _

// kernel: preact_block_forward.9
$region0: #{preact_block_forward.9}
  #allocation0 [shape = 'u32[]', space=smem, size = 0x4, offset = 0x4, fixed_abs, tag = 'smem constant byte address 0x4 - core index']
  #allocation1 [shape = 'u32[144,128]{1,0:T(1,128)}', space=vmem, size = 0x12000, scoped, tag = 'internal scratch']
  %s0 = inlined_call_operand.vmem [shape: bf16[128,128], index: 0, kind: input, shape index: {}]
  %s1 = inlined_call_operand.vmem [shape: bf16[128,128], index: 1, kind: input, shape index: {}]
  %s2 = inlined_call_operand.vmem [shape: f32[128,128], index: 2, kind: output, shape index: {0}]
  %s3 = inlined_call_operand.vmem [shape: f32[1,1,128], index: 3, kind: output, shape index: {1}]
  %s4 = inlined_call_operand.vmem [shape: f32[1,1,128], index: 4, kind: output, shape index: {2}]
  %5 = xla_tuple %s2, %s3, %s4
  %s6 = sld [smem:[#allocation0]]
  $region34: #{preact_block_forward.9} parent=0
    _
  %s8 = ssub.s32 1, %s6
  %s9 = scalar_select 0, %s8, %s6
  // Predicated region
  $region2: #{preact_block_forward.9} parent=0 // pred_check
    _
  $region3: #{preact_block_forward.9} parent=0 // pred_check_branch
    %11 = sbr.rel (0) target = $region5
  $region4: #{preact_block_forward.9} parent=0 // pred_region
    _
  $region5: #{preact_block_forward.9} parent=0 // pred_fallthru
    _
  // Predicated region
  $region6: #{preact_block_forward.9} parent=0 // pred_check
    _
  $region7: #{preact_block_forward.9} parent=0 // pred_check_branch
    %13 = sbr.rel (0) target = $region9
  $region8: #{preact_block_forward.9} parent=0 // pred_region
    _
  $region9: #{preact_block_forward.9} parent=0 // pred_fallthru
    _
  %v15 = vld [vmem:[%s0] sm:$0xf]
  %v16 = vld [vmem:[%s0 + $0x4] sm:$0xf]
  %v17 = vld [vmem:[%s0 + $0x8] sm:$0xf]
  %v18 = vld [vmem:[%s0 + $0xc] sm:$0xf]
  %v19 = vld [vmem:[%s0 + $0x10] sm:$0xf]
  %v20 = vld [vmem:[%s0 + $0x14] sm:$0xf]
  %v21 = vld [vmem:[%s0 + $0x18] sm:$0xf]
  %v22 = vld [vmem:[%s0 + $0x1c] sm:$0xf]
  %v23 = vld [vmem:[%s0 + $0x20] sm:$0xf]
  %v24 = vld [vmem:[%s0 + $0x24] sm:$0xf]
  %v25 = vld [vmem:[%s0 + $0x28] sm:$0xf]
  %v26 = vld [vmem:[%s0 + $0x2c] sm:$0xf]
  %v27 = vld [vmem:[%s0 + $0x30] sm:$0xf]
  %v28 = vld [vmem:[%s0 + $0x34] sm:$0xf]
  %v29 = vld [vmem:[%s0 + $0x38] sm:$0xf]
  %v30 = vld [vmem:[%s0 + $0x3c] sm:$0xf]
  %v31 = vld [vmem:[%s1] sm:$0xf]
  %v32 = vld [vmem:[%s1 + $0x4] sm:$0xf]
  %v33 = vld [vmem:[%s1 + $0x8] sm:$0xf]
  %v34 = vld [vmem:[%s1 + $0xc] sm:$0xf]
  %v35 = vld [vmem:[%s1 + $0x10] sm:$0xf]
  %v36 = vld [vmem:[%s1 + $0x14] sm:$0xf]
  %v37 = vld [vmem:[%s1 + $0x18] sm:$0xf]
  %v38 = vld [vmem:[%s1 + $0x1c] sm:$0xf]
  %v39 = vld [vmem:[%s1 + $0x20] sm:$0xf]
  %v40 = vld [vmem:[%s1 + $0x24] sm:$0xf]
  %v41 = vld [vmem:[%s1 + $0x28] sm:$0xf]
  %v42 = vld [vmem:[%s1 + $0x2c] sm:$0xf]
  %v43 = vld [vmem:[%s1 + $0x30] sm:$0xf]
  %v44 = vld [vmem:[%s1 + $0x34] sm:$0xf]
  %v45 = vld [vmem:[%s1 + $0x38] sm:$0xf]
  %v46 = vld [vmem:[%s1 + $0x3c] sm:$0xf]
  %v63 = vunpack.c.l.b16 %v15
  %v64 = vunpack.c.l.b16 %v16
  %v65 = vunpack.c.l.b16 %v17
  %v66 = vunpack.c.l.b16 %v18
  %v67 = vunpack.c.l.b16 %v19
  %v68 = vunpack.c.l.b16 %v20
  %v69 = vunpack.c.l.b16 %v21
  %v70 = vunpack.c.l.b16 %v22
  %v71 = vunpack.c.l.b16 %v23
  %v72 = vunpack.c.l.b16 %v24
  %v73 = vunpack.c.l.b16 %v25
  %v74 = vunpack.c.l.b16 %v26
  %v75 = vunpack.c.l.b16 %v27
  %v76 = vunpack.c.l.b16 %v28
  %v77 = vunpack.c.l.b16 %v29
  %v78 = vunpack.c.l.b16 %v30
  %v79 = vpack.c.b16 %v64, %v63
  %v80 = vpack.c.b16 %v66, %v65
  %v81 = vpack.c.b16 %v68, %v67
  %v82 = vpack.c.b16 %v70, %v69
  %v83 = vpack.c.b16 %v72, %v71
  %v84 = vpack.c.b16 %v74, %v73
  %v85 = vpack.c.b16 %v76, %v75
  %v86 = vpack.c.b16 %v78, %v77
  %v111 = vunpack.c.l.b16 %v31
  %v112 = vunpack.c.l.b16 %v32
  %v113 = vunpack.c.l.b16 %v33
  %v114 = vunpack.c.l.b16 %v34
  %v115 = vunpack.c.l.b16 %v35
  %v116 = vunpack.c.l.b16 %v36
  %v117 = vunpack.c.l.b16 %v37
  %v118 = vunpack.c.l.b16 %v38
  %v119 = vunpack.c.l.b16 %v39
  %v120 = vunpack.c.l.b16 %v40
  %v121 = vunpack.c.l.b16 %v41
  %v122 = vunpack.c.l.b16 %v42
  %v123 = vunpack.c.l.b16 %v43
  %v124 = vunpack.c.l.b16 %v44
  %v125 = vunpack.c.l.b16 %v45
  %v126 = vunpack.c.l.b16 %v46
  %v127 = vpack.c.b16 %v112, %v111
  %v128 = vpack.c.b16 %v114, %v113
  %v129 = vpack.c.b16 %v116, %v115
  %v130 = vpack.c.b16 %v118, %v117
  %v131 = vpack.c.b16 %v120, %v119
  %v132 = vpack.c.b16 %v122, %v121
  %v133 = vpack.c.b16 %v124, %v123
  %v134 = vpack.c.b16 %v126, %v125
  %143 = vmatprep.subr.bf16.mxu0 0
  %144 = vmatpush1.bf16.msra.mxu0 %v127
  %145 = vmatprep.subr.bf16.mxu0 0
  %146 = vmatpush1.bf16.msra.mxu0 %v128
  %147 = vmatprep.subr.bf16.mxu0 0
  %148 = vmatpush1.bf16.msra.mxu0 %v129
  %149 = vmatprep.subr.bf16.mxu0 0
  %150 = vmatpush1.bf16.msra.mxu0 %v130
  %151 = vmatprep.subr.bf16.mxu0 0
  %152 = vmatpush1.bf16.msra.mxu0 %v131
  %153 = vmatprep.subr.bf16.mxu0 0
  %154 = vmatpush1.bf16.msra.mxu0 %v132
  %155 = vmatprep.subr.bf16.mxu0 0
  %156 = vmatpush1.bf16.msra.mxu0 %v133
  %157 = vmatprep.subr.bf16.mxu0 0
  %158 = vmatpush1.bf16.msra.mxu0 %v134
  %159 = vmatprep.subr.bf16.mxu0 0
  %160 = vmatpush1.bf16.msra.mxu0 0
  %161 = vmatprep.subr.bf16.mxu0 0
  %162 = vmatpush1.bf16.msra.mxu0 0
  %163 = vmatprep.subr.bf16.mxu0 0
  %164 = vmatpush1.bf16.msra.mxu0 0
  %165 = vmatprep.subr.bf16.mxu0 0
  %166 = vmatpush1.bf16.msra.mxu0 0
  %167 = vmatprep.subr.bf16.mxu0 0
  %168 = vmatpush1.bf16.msra.mxu0 0
  %169 = vmatprep.subr.bf16.mxu0 0
  %170 = vmatpush1.bf16.msra.mxu0 0
  %171 = vmatprep.subr.bf16.mxu0 0
  %172 = vmatpush1.bf16.msra.mxu0 0
  %173 = vmatprep.subr.bf16.mxu0 0
  %174 = vmatpush1.bf16.msra.mxu0 0
  %175 = vmatprep.mubr.bf16.mxu0 0
  %176 = vmatmul.mubr.bf16.gmra.mrb[0].mxu0 %v79
  %v177 = vpop.f32.mrb[0].mxu0
  %v178 = vadd.f32 0.0, %v177
  %v179 = vpop.f32.mrb[0].mxu0
  %v180 = vpop.f32.mrb[0].mxu0
  %v181 = vadd.f32 0.0, %v180
  %v182 = vpop.f32.mrb[0].mxu0
  %183 = vmatprep.mubr.bf16.mxu0 0
  %184 = vmatmul.mubr.bf16.gmra.mrb[0].mxu0 %v80
  %v185 = vpop.f32.mrb[0].mxu0
  %v186 = vadd.f32 0.0, %v185
  %v187 = vpop.f32.mrb[0].mxu0
  %v188 = vpop.f32.mrb[0].mxu0
  %v189 = vadd.f32 0.0, %v188
  %v190 = vpop.f32.mrb[0].mxu0
  %191 = vmatprep.mubr.bf16.mxu0 0
  %192 = vmatmul.mubr.bf16.gmra.mrb[0].mxu0 %v81
  %v193 = vpop.f32.mrb[0].mxu0
  %v194 = vadd.f32 0.0, %v193
  %v195 = vpop.f32.mrb[0].mxu0
  %v196 = vpop.f32.mrb[0].mxu0
  %v197 = vadd.f32 0.0, %v196
  %v198 = vpop.f32.mrb[0].mxu0
  %199 = vmatprep.mubr.bf16.mxu0 0
  %200 = vmatmul.mubr.bf16.gmra.mrb[0].mxu0 %v82
  %v201 = vpop.f32.mrb[0].mxu0
  %v202 = vadd.f32 0.0, %v201
  %v203 = vpop.f32.mrb[0].mxu0
  %v204 = vpop.f32.mrb[0].mxu0
  %v205 = vadd.f32 0.0, %v204
  %v206 = vpop.f32.mrb[0].mxu0
  %207 = vmatprep.mubr.bf16.mxu0 0
  %208 = vmatmul.mubr.bf16.gmra.mrb[0].mxu0 %v83
  %v209 = vpop.f32.mrb[0].mxu0
  %v210 = vadd.f32 0.0, %v209
  %v211 = vpop.f32.mrb[0].mxu0
  %v212 = vpop.f32.mrb[0].mxu0
  %v213 = vadd.f32 0.0, %v212
  %v214 = vpop.f32.mrb[0].mxu0
  %215 = vmatprep.mubr.bf16.mxu0 0
  %216 = vmatmul.mubr.bf16.gmra.mrb[0].mxu0 %v84
  %v217 = vpop.f32.mrb[0].mxu0
  %v218 = vadd.f32 0.0, %v217
  %v219 = vpop.f32.mrb[0].mxu0
  %v220 = vpop.f32.mrb[0].mxu0
  %v221 = vadd.f32 0.0, %v220
  %v222 = vpop.f32.mrb[0].mxu0
  %223 = vmatprep.mubr.bf16.mxu0 0
  %224 = vmatmul.mubr.bf16.gmra.mrb[0].mxu0 %v85
  %v225 = vpop.f32.mrb[0].mxu0
  %v226 = vadd.f32 0.0, %v225
  %v227 = vpop.f32.mrb[0].mxu0
  %v228 = vpop.f32.mrb[0].mxu0
  %v229 = vadd.f32 0.0, %v228
  %v230 = vpop.f32.mrb[0].mxu0
  %231 = vmatprep.mubr.bf16.mxu0 0
  %232 = vmatmul.mubr.bf16.gmra.mrb[0].mxu0 %v86
  %v233 = vpop.f32.mrb[0].mxu0
  %v234 = vadd.f32 0.0, %v233
  %v235 = vpop.f32.mrb[0].mxu0
  %v236 = vpop.f32.mrb[0].mxu0
  %v237 = vadd.f32 0.0, %v236
  %v238 = vpop.f32.mrb[0].mxu0
  %239 = vdwg.mxu0
  %240 = vst [vmem:[%s2] sm:$0xff] %v178
  %241 = vst [vmem:[%s2 + $0x8] sm:$0xff] %v181
  %242 = vst [vmem:[%s2 + $0x10] sm:$0xff] %v186
  %243 = vst [vmem:[%s2 + $0x18] sm:$0xff] %v189
  %244 = vst [vmem:[%s2 + $0x20] sm:$0xff] %v194
  %245 = vst [vmem:[%s2 + $0x28] sm:$0xff] %v197
  %246 = vst [vmem:[%s2 + $0x30] sm:$0xff] %v202
  %247 = vst [vmem:[%s2 + $0x38] sm:$0xff] %v205
  %248 = vst [vmem:[%s2 + $0x40] sm:$0xff] %v210
  %249 = vst [vmem:[%s2 + $0x48] sm:$0xff] %v213
  %250 = vst [vmem:[%s2 + $0x50] sm:$0xff] %v218
  %251 = vst [vmem:[%s2 + $0x58] sm:$0xff] %v221
  %252 = vst [vmem:[%s2 + $0x60] sm:$0xff] %v226
  %253 = vst [vmem:[%s2 + $0x68] sm:$0xff] %v229
  %254 = vst [vmem:[%s2 + $0x70] sm:$0xff] %v234
  %255 = vst [vmem:[%s2 + $0x78] sm:$0xff] %v237
  %v256 = vadd.f32 %v178, %v181
  %v257 = vadd.f32 %v256, %v186
  %v258 = vadd.f32 %v257, %v189
  %v259 = vadd.f32 %v258, %v194
  %v260 = vadd.f32 %v259, %v197
  %v261 = vadd.f32 %v260, %v202
  %v262 = vadd.f32 %v261, %v205
  %v263 = vadd.f32 %v262, %v210
  %v264 = vadd.f32 %v263, %v213
  %v265 = vadd.f32 %v264, %v218
  %v266 = vadd.f32 %v265, %v221
  %v267 = vadd.f32 %v266, %v226
  %v268 = vadd.f32 %v267, %v229
  %v269 = vadd.f32 %v268, %v234
  %v270 = vadd.f32 %v269, %v237
  %v271 = vrot.slane %v270, 4
  %v272 = vadd.f32 %v270, %v271
  %v273 = vrot.slane %v272, 2
  %v274 = vadd.f32 %v272, %v273
  %v275 = vrot.slane %v274, 1
  %v276 = vadd.f32 %v274, %v275
  %277 = vst [vmem:[%s3] sm:$0x1] %v276
  %v278 = vmul.f32 %v178, %v178
  %v279 = vmul.f32 %v181, %v181
  %v280 = vmul.f32 %v186, %v186
  %v281 = vmul.f32 %v189, %v189
  %v282 = vmul.f32 %v194, %v194
  %v283 = vmul.f32 %v197, %v197
  %v284 = vmul.f32 %v202, %v202
  %v285 = vmul.f32 %v205, %v205
  %v286 = vmul.f32 %v210, %v210
  %v287 = vmul.f32 %v213, %v213
  %v288 = vmul.f32 %v218, %v218
  %v289 = vmul.f32 %v221, %v221
  %v290 = vmul.f32 %v226, %v226
  %v291 = vmul.f32 %v229, %v229
  %v292 = vmul.f32 %v234, %v234
  %v293 = vmul.f32 %v237, %v237
  %v294 = vadd.f32 %v278, %v279
  %v295 = vadd.f32 %v294, %v280
  %v296 = vadd.f32 %v295, %v281
  %v297 = vadd.f32 %v296, %v282
  %v298 = vadd.f32 %v297, %v283
  %v299 = vadd.f32 %v298, %v284
  %v300 = vadd.f32 %v299, %v285
  %v301 = vadd.f32 %v300, %v286
  %v302 = vadd.f32 %v301, %v287
  %v303 = vadd.f32 %v302, %v288
  %v304 = vadd.f32 %v303, %v289
  %v305 = vadd.f32 %v304, %v290
  %v306 = vadd.f32 %v305, %v291
  %v307 = vadd.f32 %v306, %v292
  %v308 = vadd.f32 %v307, %v293
  %v309 = vrot.slane %v308, 4
  %v310 = vadd.f32 %v308, %v309
  %v311 = vrot.slane %v310, 2
  %v312 = vadd.f32 %v310, %v311
  %v313 = vrot.slane %v312, 1
  %v314 = vadd.f32 %v312, %v313
  %315 = vst [vmem:[%s4] sm:$0x1] %v314
  // Predicated region
  $region10: #{preact_block_forward.9} parent=0 // pred_check
    _
  $region11: #{preact_block_forward.9} parent=0 // pred_check_branch
    %317 = sbr.rel (0) target = $region13
  $region12: #{preact_block_forward.9} parent=0 // pred_region
    _
  $region13: #{preact_block_forward.9} parent=0 // pred_fallthru
    _
  // Predicated region
  $region14: #{preact_block_forward.9} parent=0 // pred_check
    _
  $region15: #{preact_block_forward.9} parent=0 // pred_check_branch
    %319 = sbr.rel (0) target = $region17
  $region16: #{preact_block_forward.9} parent=0 // pred_region
    _
  $region17: #{preact_block_forward.9} parent=0 // pred_fallthru
    _
  // Predicated region
  $region18: #{preact_block_forward.9} parent=0 // pred_check
    _
  $region19: #{preact_block_forward.9} parent=0 // pred_check_branch
    %321 = sbr.rel (0) target = $region21
  $region20: #{preact_block_forward.9} parent=0 // pred_region
    _
  $region21: #{preact_block_forward.9} parent=0 // pred_fallthru
    _
  // Predicated region
  $region22: #{preact_block_forward.9} parent=0 // pred_check
    _
  $region23: #{preact_block_forward.9} parent=0 // pred_check_branch
    %323 = sbr.rel (0) target = $region25
  $region24: #{preact_block_forward.9} parent=0 // pred_region
    _
  $region25: #{preact_block_forward.9} parent=0 // pred_fallthru
    _
  // Predicated region
  $region26: #{preact_block_forward.9} parent=0 // pred_check
    _
  $region27: #{preact_block_forward.9} parent=0 // pred_check_branch
    %325 = sbr.rel (0) target = $region29
  $region28: #{preact_block_forward.9} parent=0 // pred_region
    _
  $region29: #{preact_block_forward.9} parent=0 // pred_fallthru
    _
  // Predicated region
  $region30: #{preact_block_forward.9} parent=0 // pred_check
    _
  $region31: #{preact_block_forward.9} parent=0 // pred_check_branch
    %327 = sbr.rel (0) target = $region33
  $region32: #{preact_block_forward.9} parent=0 // pred_region
    _
  $region33: #{preact_block_forward.9} parent=0 // pred_fallthru
    _

// kernel: preact_block_forward.10
$region0: #{preact_block_forward.10}
  #allocation0 [shape = 'u32[]', space=smem, size = 0x4, offset = 0x4, fixed_abs, tag = 'smem constant byte address 0x4 - core index']
  #allocation1 [shape = 'u32[144,128]{1,0:T(1,128)}', space=vmem, size = 0x12000, scoped, tag = 'internal scratch']
  %s0 = inlined_call_operand.vmem [shape: f32[128,128], index: 0, kind: input, shape index: {}]
  %s1 = inlined_call_operand.vmem [shape: f32[1,128], index: 1, kind: input, shape index: {}]
  %s2 = inlined_call_operand.vmem [shape: f32[1,128], index: 2, kind: input, shape index: {}]
  %s3 = inlined_call_operand.vmem [shape: f32[128,128], index: 3, kind: output, shape index: {0}]
  %s4 = inlined_call_operand.vmem [shape: bf16[128,128], index: 4, kind: output, shape index: {1}]
  %5 = xla_tuple %s3, %s4
  %s6 = sld [smem:[#allocation0]]
  $region30: #{preact_block_forward.10} parent=0
    _
  %s8 = ssub.s32 1, %s6
  %s9 = scalar_select 0, %s8, %s6
  // Predicated region
  $region2: #{preact_block_forward.10} parent=0 // pred_check
    _
  $region3: #{preact_block_forward.10} parent=0 // pred_check_branch
    %11 = sbr.rel (0) target = $region5
  $region4: #{preact_block_forward.10} parent=0 // pred_region
    _
  $region5: #{preact_block_forward.10} parent=0 // pred_fallthru
    _
  // Predicated region
  $region6: #{preact_block_forward.10} parent=0 // pred_check
    _
  $region7: #{preact_block_forward.10} parent=0 // pred_check_branch
    %13 = sbr.rel (0) target = $region9
  $region8: #{preact_block_forward.10} parent=0 // pred_region
    _
  $region9: #{preact_block_forward.10} parent=0 // pred_fallthru
    _
  // Predicated region
  $region10: #{preact_block_forward.10} parent=0 // pred_check
    _
  $region11: #{preact_block_forward.10} parent=0 // pred_check_branch
    %15 = sbr.rel (0) target = $region13
  $region12: #{preact_block_forward.10} parent=0 // pred_region
    _
  $region13: #{preact_block_forward.10} parent=0 // pred_fallthru
    _
  %v16 = vld [vmem:[%s0] sm:$0xff]
  %v17 = vld [vmem:[%s0 + $0x8] sm:$0xff]
  %v18 = vld [vmem:[%s0 + $0x10] sm:$0xff]
  %v19 = vld [vmem:[%s0 + $0x18] sm:$0xff]
  %v20 = vld [vmem:[%s0 + $0x20] sm:$0xff]
  %v21 = vld [vmem:[%s0 + $0x28] sm:$0xff]
  %v22 = vld [vmem:[%s0 + $0x30] sm:$0xff]
  %v23 = vld [vmem:[%s0 + $0x38] sm:$0xff]
  %v24 = vld [vmem:[%s0 + $0x40] sm:$0xff]
  %v25 = vld [vmem:[%s0 + $0x48] sm:$0xff]
  %v26 = vld [vmem:[%s0 + $0x50] sm:$0xff]
  %v27 = vld [vmem:[%s0 + $0x58] sm:$0xff]
  %v28 = vld [vmem:[%s0 + $0x60] sm:$0xff]
  %v29 = vld [vmem:[%s0 + $0x68] sm:$0xff]
  %v30 = vld [vmem:[%s0 + $0x70] sm:$0xff]
  %v31 = vld [vmem:[%s0 + $0x78] sm:$0xff]
  %v32 = vld [vmem:[%s1] sm:$0x1]
  %v34 = vlaneseq
  %v35 = vshrl.u32 %v34, 7
  %v36 = vsub.s32 0, %v35
  %v37 = vrot.slane %v32, %v36
  %v39 = vmul.f32 %v16, %v37
  %v40 = vmul.f32 %v17, %v37
  %v41 = vmul.f32 %v18, %v37
  %v42 = vmul.f32 %v19, %v37
  %v43 = vmul.f32 %v20, %v37
  %v44 = vmul.f32 %v21, %v37
  %v45 = vmul.f32 %v22, %v37
  %v46 = vmul.f32 %v23, %v37
  %v47 = vmul.f32 %v24, %v37
  %v48 = vmul.f32 %v25, %v37
  %v49 = vmul.f32 %v26, %v37
  %v50 = vmul.f32 %v27, %v37
  %v51 = vmul.f32 %v28, %v37
  %v52 = vmul.f32 %v29, %v37
  %v53 = vmul.f32 %v30, %v37
  %v54 = vmul.f32 %v31, %v37
  %v55 = vld [vmem:[%s2] sm:$0x1]
  %v57 = vlaneseq
  %v58 = vshrl.u32 %v57, 7
  %v59 = vsub.s32 0, %v58
  %v60 = vrot.slane %v55, %v59
  %v62 = vadd.f32 %v39, %v60
  %v63 = vadd.f32 %v40, %v60
  %v64 = vadd.f32 %v41, %v60
  %v65 = vadd.f32 %v42, %v60
  %v66 = vadd.f32 %v43, %v60
  %v67 = vadd.f32 %v44, %v60
  %v68 = vadd.f32 %v45, %v60
  %v69 = vadd.f32 %v46, %v60
  %v70 = vadd.f32 %v47, %v60
  %v71 = vadd.f32 %v48, %v60
  %v72 = vadd.f32 %v49, %v60
  %v73 = vadd.f32 %v50, %v60
  %v74 = vadd.f32 %v51, %v60
  %v75 = vadd.f32 %v52, %v60
  %v76 = vadd.f32 %v53, %v60
  %v77 = vadd.f32 %v54, %v60
  %v78 = vmax.f32 %v62, 0.0
  %v79 = vmax.f32 %v63, 0.0
  %v80 = vmax.f32 %v64, 0.0
  %v81 = vmax.f32 %v65, 0.0
  %v82 = vmax.f32 %v66, 0.0
  %v83 = vmax.f32 %v67, 0.0
  %v84 = vmax.f32 %v68, 0.0
  %v85 = vmax.f32 %v69, 0.0
  %v86 = vmax.f32 %v70, 0.0
  %v87 = vmax.f32 %v71, 0.0
  %v88 = vmax.f32 %v72, 0.0
  %v89 = vmax.f32 %v73, 0.0
  %v90 = vmax.f32 %v74, 0.0
  %v91 = vmax.f32 %v75, 0.0
  %v92 = vmax.f32 %v76, 0.0
  %v93 = vmax.f32 %v77, 0.0
  %94 = vst [vmem:[%s3] sm:$0xff] %v78
  %95 = vst [vmem:[%s3 + $0x8] sm:$0xff] %v79
  %96 = vst [vmem:[%s3 + $0x10] sm:$0xff] %v80
  %97 = vst [vmem:[%s3 + $0x18] sm:$0xff] %v81
  %98 = vst [vmem:[%s3 + $0x20] sm:$0xff] %v82
  %99 = vst [vmem:[%s3 + $0x28] sm:$0xff] %v83
  %100 = vst [vmem:[%s3 + $0x30] sm:$0xff] %v84
  %101 = vst [vmem:[%s3 + $0x38] sm:$0xff] %v85
  %102 = vst [vmem:[%s3 + $0x40] sm:$0xff] %v86
  %103 = vst [vmem:[%s3 + $0x48] sm:$0xff] %v87
  %104 = vst [vmem:[%s3 + $0x50] sm:$0xff] %v88
  %105 = vst [vmem:[%s3 + $0x58] sm:$0xff] %v89
  %106 = vst [vmem:[%s3 + $0x60] sm:$0xff] %v90
  %107 = vst [vmem:[%s3 + $0x68] sm:$0xff] %v91
  %108 = vst [vmem:[%s3 + $0x70] sm:$0xff] %v92
  %109 = vst [vmem:[%s3 + $0x78] sm:$0xff] %v93
  %v110 = vpack.c.bf16 %v79, %v78
  %v111 = vpack.c.bf16 %v81, %v80
  %v112 = vpack.c.bf16 %v83, %v82
  %v113 = vpack.c.bf16 %v85, %v84
  %v114 = vpack.c.bf16 %v87, %v86
  %v115 = vpack.c.bf16 %v89, %v88
  %v116 = vpack.c.bf16 %v91, %v90
  %v117 = vpack.c.bf16 %v93, %v92
  %v126 = vunpack.c.l.b16 %v110
  %v127 = vunpack.c.h.b16 %v110
  %v128 = vunpack.c.l.b16 %v111
  %v129 = vunpack.c.h.b16 %v111
  %v130 = vunpack.c.l.b16 %v112
  %v131 = vunpack.c.h.b16 %v112
  %v132 = vunpack.c.l.b16 %v113
  %v133 = vunpack.c.h.b16 %v113
  %v134 = vunpack.c.l.b16 %v114
  %v135 = vunpack.c.h.b16 %v114
  %v136 = vunpack.c.l.b16 %v115
  %v137 = vunpack.c.h.b16 %v115
  %v138 = vunpack.c.l.b16 %v116
  %v139 = vunpack.c.h.b16 %v116
  %v140 = vunpack.c.l.b16 %v117
  %v141 = vunpack.c.h.b16 %v117
  %v142 = vpack.c.b16 %v126, %v126
  %v143 = vpack.c.b16 %v127, %v127
  %v144 = vpack.c.b16 %v128, %v128
  %v145 = vpack.c.b16 %v129, %v129
  %v146 = vpack.c.b16 %v130, %v130
  %v147 = vpack.c.b16 %v131, %v131
  %v148 = vpack.c.b16 %v132, %v132
  %v149 = vpack.c.b16 %v133, %v133
  %v150 = vpack.c.b16 %v134, %v134
  %v151 = vpack.c.b16 %v135, %v135
  %v152 = vpack.c.b16 %v136, %v136
  %v153 = vpack.c.b16 %v137, %v137
  %v154 = vpack.c.b16 %v138, %v138
  %v155 = vpack.c.b16 %v139, %v139
  %v156 = vpack.c.b16 %v140, %v140
  %v157 = vpack.c.b16 %v141, %v141
  %174 = vst [vmem:[%s4] sm:$0xf] %v142
  %175 = vst [vmem:[%s4 + $0x4] sm:$0xf] %v143
  %176 = vst [vmem:[%s4 + $0x8] sm:$0xf] %v144
  %177 = vst [vmem:[%s4 + $0xc] sm:$0xf] %v145
  %178 = vst [vmem:[%s4 + $0x10] sm:$0xf] %v146
  %179 = vst [vmem:[%s4 + $0x14] sm:$0xf] %v147
  %180 = vst [vmem:[%s4 + $0x18] sm:$0xf] %v148
  %181 = vst [vmem:[%s4 + $0x1c] sm:$0xf] %v149
  %182 = vst [vmem:[%s4 + $0x20] sm:$0xf] %v150
  %183 = vst [vmem:[%s4 + $0x24] sm:$0xf] %v151
  %184 = vst [vmem:[%s4 + $0x28] sm:$0xf] %v152
  %185 = vst [vmem:[%s4 + $0x2c] sm:$0xf] %v153
  %186 = vst [vmem:[%s4 + $0x30] sm:$0xf] %v154
  %187 = vst [vmem:[%s4 + $0x34] sm:$0xf] %v155
  %188 = vst [vmem:[%s4 + $0x38] sm:$0xf] %v156
  %189 = vst [vmem:[%s4 + $0x3c] sm:$0xf] %v157
  // Predicated region
  $region14: #{preact_block_forward.10} parent=0 // pred_check
    _
  $region15: #{preact_block_forward.10} parent=0 // pred_check_branch
    %191 = sbr.rel (0) target = $region17
  $region16: #{preact_block_forward.10} parent=0 // pred_region
    _
  $region17: #{preact_block_forward.10} parent=0 // pred_fallthru
    _
  // Predicated region
  $region18: #{preact_block_forward.10} parent=0 // pred_check
    _
  $region19: #{preact_block_forward.10} parent=0 // pred_check_branch
    %193 = sbr.rel (0) target = $region21
  $region20: #{preact_block_forward.10} parent=0 // pred_region
    _
  $region21: #{preact_block_forward.10} parent=0 // pred_fallthru
    _
  // Predicated region
  $region22: #{preact_block_forward.10} parent=0 // pred_check
    _
  $region23: #{preact_block_forward.10} parent=0 // pred_check_branch
    %195 = sbr.rel (0) target = $region25
  $region24: #{preact_block_forward.10} parent=0 // pred_region
    _
  $region25: #{preact_block_forward.10} parent=0 // pred_fallthru
    _
  // Predicated region
  $region26: #{preact_block_forward.10} parent=0 // pred_check
    _
  $region27: #{preact_block_forward.10} parent=0 // pred_check_branch
    %197 = sbr.rel (0) target = $region29
  $region28: #{preact_block_forward.10} parent=0 // pred_region
    _
  $region29: #{preact_block_forward.10} parent=0 // pred_fallthru
    _

// kernel: preact_block_forward.8
$region0: #{preact_block_forward.8}
  #allocation0 [shape = 'u32[]', space=smem, size = 0x4, offset = 0x4, fixed_abs, tag = 'smem constant byte address 0x4 - core index']
  #allocation1 [shape = 'u32[144,128]{1,0:T(1,128)}', space=vmem, size = 0x12000, scoped, tag = 'internal scratch']
  %s0 = inlined_call_operand.vmem [shape: bf16[128,128], index: 0, kind: input, shape index: {}]
  %s1 = inlined_call_operand.vmem [shape: bf16[128,128], index: 1, kind: input, shape index: {}]
  %s2 = inlined_call_operand.vmem [shape: f32[128,128], index: 2, kind: output, shape index: {}]
  %s3 = sld [smem:[#allocation0]]
  $region18: #{preact_block_forward.8} parent=0
    _
  %s5 = ssub.s32 1, %s3
  %s6 = scalar_select 0, %s5, %s3
  // Predicated region
  $region2: #{preact_block_forward.8} parent=0 // pred_check
    _
  $region3: #{preact_block_forward.8} parent=0 // pred_check_branch
    %8 = sbr.rel (0) target = $region5
  $region4: #{preact_block_forward.8} parent=0 // pred_region
    _
  $region5: #{preact_block_forward.8} parent=0 // pred_fallthru
    _
  // Predicated region
  $region6: #{preact_block_forward.8} parent=0 // pred_check
    _
  $region7: #{preact_block_forward.8} parent=0 // pred_check_branch
    %10 = sbr.rel (0) target = $region9
  $region8: #{preact_block_forward.8} parent=0 // pred_region
    _
  $region9: #{preact_block_forward.8} parent=0 // pred_fallthru
    _
  %v12 = vld [vmem:[%s0] sm:$0xf]
  %v13 = vld [vmem:[%s0 + $0x4] sm:$0xf]
  %v14 = vld [vmem:[%s0 + $0x8] sm:$0xf]
  %v15 = vld [vmem:[%s0 + $0xc] sm:$0xf]
  %v16 = vld [vmem:[%s0 + $0x10] sm:$0xf]
  %v17 = vld [vmem:[%s0 + $0x14] sm:$0xf]
  %v18 = vld [vmem:[%s0 + $0x18] sm:$0xf]
  %v19 = vld [vmem:[%s0 + $0x1c] sm:$0xf]
  %v20 = vld [vmem:[%s0 + $0x20] sm:$0xf]
  %v21 = vld [vmem:[%s0 + $0x24] sm:$0xf]
  %v22 = vld [vmem:[%s0 + $0x28] sm:$0xf]
  %v23 = vld [vmem:[%s0 + $0x2c] sm:$0xf]
  %v24 = vld [vmem:[%s0 + $0x30] sm:$0xf]
  %v25 = vld [vmem:[%s0 + $0x34] sm:$0xf]
  %v26 = vld [vmem:[%s0 + $0x38] sm:$0xf]
  %v27 = vld [vmem:[%s0 + $0x3c] sm:$0xf]
  %v28 = vld [vmem:[%s1] sm:$0xf]
  %v29 = vld [vmem:[%s1 + $0x4] sm:$0xf]
  %v30 = vld [vmem:[%s1 + $0x8] sm:$0xf]
  %v31 = vld [vmem:[%s1 + $0xc] sm:$0xf]
  %v32 = vld [vmem:[%s1 + $0x10] sm:$0xf]
  %v33 = vld [vmem:[%s1 + $0x14] sm:$0xf]
  %v34 = vld [vmem:[%s1 + $0x18] sm:$0xf]
  %v35 = vld [vmem:[%s1 + $0x1c] sm:$0xf]
  %v36 = vld [vmem:[%s1 + $0x20] sm:$0xf]
  %v37 = vld [vmem:[%s1 + $0x24] sm:$0xf]
  %v38 = vld [vmem:[%s1 + $0x28] sm:$0xf]
  %v39 = vld [vmem:[%s1 + $0x2c] sm:$0xf]
  %v40 = vld [vmem:[%s1 + $0x30] sm:$0xf]
  %v41 = vld [vmem:[%s1 + $0x34] sm:$0xf]
  %v42 = vld [vmem:[%s1 + $0x38] sm:$0xf]
  %v43 = vld [vmem:[%s1 + $0x3c] sm:$0xf]
  %v60 = vunpack.c.l.b16 %v12
  %v61 = vunpack.c.l.b16 %v13
  %v62 = vunpack.c.l.b16 %v14
  %v63 = vunpack.c.l.b16 %v15
  %v64 = vunpack.c.l.b16 %v16
  %v65 = vunpack.c.l.b16 %v17
  %v66 = vunpack.c.l.b16 %v18
  %v67 = vunpack.c.l.b16 %v19
  %v68 = vunpack.c.l.b16 %v20
  %v69 = vunpack.c.l.b16 %v21
  %v70 = vunpack.c.l.b16 %v22
  %v71 = vunpack.c.l.b16 %v23
  %v72 = vunpack.c.l.b16 %v24
  %v73 = vunpack.c.l.b16 %v25
  %v74 = vunpack.c.l.b16 %v26
  %v75 = vunpack.c.l.b16 %v27
  %v76 = vpack.c.b16 %v61, %v60
  %v77 = vpack.c.b16 %v63, %v62
  %v78 = vpack.c.b16 %v65, %v64
  %v79 = vpack.c.b16 %v67, %v66
  %v80 = vpack.c.b16 %v69, %v68
  %v81 = vpack.c.b16 %v71, %v70
  %v82 = vpack.c.b16 %v73, %v72
  %v83 = vpack.c.b16 %v75, %v74
  %v108 = vunpack.c.l.b16 %v28
  %v109 = vunpack.c.l.b16 %v29
  %v110 = vunpack.c.l.b16 %v30
  %v111 = vunpack.c.l.b16 %v31
  %v112 = vunpack.c.l.b16 %v32
  %v113 = vunpack.c.l.b16 %v33
  %v114 = vunpack.c.l.b16 %v34
  %v115 = vunpack.c.l.b16 %v35
  %v116 = vunpack.c.l.b16 %v36
  %v117 = vunpack.c.l.b16 %v37
  %v118 = vunpack.c.l.b16 %v38
  %v119 = vunpack.c.l.b16 %v39
  %v120 = vunpack.c.l.b16 %v40
  %v121 = vunpack.c.l.b16 %v41
  %v122 = vunpack.c.l.b16 %v42
  %v123 = vunpack.c.l.b16 %v43
  %v124 = vpack.c.b16 %v109, %v108
  %v125 = vpack.c.b16 %v111, %v110
  %v126 = vpack.c.b16 %v113, %v112
  %v127 = vpack.c.b16 %v115, %v114
  %v128 = vpack.c.b16 %v117, %v116
  %v129 = vpack.c.b16 %v119, %v118
  %v130 = vpack.c.b16 %v121, %v120
  %v131 = vpack.c.b16 %v123, %v122
  %140 = vmatprep.subr.bf16.mxu0 0
  %141 = vmatpush1.bf16.msra.mxu0 %v124
  %142 = vmatprep.subr.bf16.mxu0 0
  %143 = vmatpush1.bf16.msra.mxu0 %v125
  %144 = vmatprep.subr.bf16.mxu0 0
  %145 = vmatpush1.bf16.msra.mxu0 %v126
  %146 = vmatprep.subr.bf16.mxu0 0
  %147 = vmatpush1.bf16.msra.mxu0 %v127
  %148 = vmatprep.subr.bf16.mxu0 0
  %149 = vmatpush1.bf16.msra.mxu0 %v128
  %150 = vmatprep.subr.bf16.mxu0 0
  %151 = vmatpush1.bf16.msra.mxu0 %v129
  %152 = vmatprep.subr.bf16.mxu0 0
  %153 = vmatpush1.bf16.msra.mxu0 %v130
  %154 = vmatprep.subr.bf16.mxu0 0
  %155 = vmatpush1.bf16.msra.mxu0 %v131
  %156 = vmatprep.subr.bf16.mxu0 0
  %157 = vmatpush1.bf16.msra.mxu0 0
  %158 = vmatprep.subr.bf16.mxu0 0
  %159 = vmatpush1.bf16.msra.mxu0 0
  %160 = vmatprep.subr.bf16.mxu0 0
  %161 = vmatpush1.bf16.msra.mxu0 0
  %162 = vmatprep.subr.bf16.mxu0 0
  %163 = vmatpush1.bf16.msra.mxu0 0
  %164 = vmatprep.subr.bf16.mxu0 0
  %165 = vmatpush1.bf16.msra.mxu0 0
  %166 = vmatprep.subr.bf16.mxu0 0
  %167 = vmatpush1.bf16.msra.mxu0 0
  %168 = vmatprep.subr.bf16.mxu0 0
  %169 = vmatpush1.bf16.msra.mxu0 0
  %170 = vmatprep.subr.bf16.mxu0 0
  %171 = vmatpush1.bf16.msra.mxu0 0
  %172 = vmatprep.mubr.bf16.mxu0 0
  %173 = vmatmul.mubr.bf16.gmra.mrb[0].mxu0 %v76
  %v174 = vpop.f32.mrb[0].mxu0
  %v175 = vadd.f32 0.0, %v174
  %v176 = vpop.f32.mrb[0].mxu0
  %v177 = vpop.f32.mrb[0].mxu0
  %v178 = vadd.f32 0.0, %v177
  %v179 = vpop.f32.mrb[0].mxu0
  %180 = vmatprep.mubr.bf16.mxu0 0
  %181 = vmatmul.mubr.bf16.gmra.mrb[0].mxu0 %v77
  %v182 = vpop.f32.mrb[0].mxu0
  %v183 = vadd.f32 0.0, %v182
  %v184 = vpop.f32.mrb[0].mxu0
  %v185 = vpop.f32.mrb[0].mxu0
  %v186 = vadd.f32 0.0, %v185
  %v187 = vpop.f32.mrb[0].mxu0
  %188 = vmatprep.mubr.bf16.mxu0 0
  %189 = vmatmul.mubr.bf16.gmra.mrb[0].mxu0 %v78
  %v190 = vpop.f32.mrb[0].mxu0
  %v191 = vadd.f32 0.0, %v190
  %v192 = vpop.f32.mrb[0].mxu0
  %v193 = vpop.f32.mrb[0].mxu0
  %v194 = vadd.f32 0.0, %v193
  %v195 = vpop.f32.mrb[0].mxu0
  %196 = vmatprep.mubr.bf16.mxu0 0
  %197 = vmatmul.mubr.bf16.gmra.mrb[0].mxu0 %v79
  %v198 = vpop.f32.mrb[0].mxu0
  %v199 = vadd.f32 0.0, %v198
  %v200 = vpop.f32.mrb[0].mxu0
  %v201 = vpop.f32.mrb[0].mxu0
  %v202 = vadd.f32 0.0, %v201
  %v203 = vpop.f32.mrb[0].mxu0
  %204 = vmatprep.mubr.bf16.mxu0 0
  %205 = vmatmul.mubr.bf16.gmra.mrb[0].mxu0 %v80
  %v206 = vpop.f32.mrb[0].mxu0
  %v207 = vadd.f32 0.0, %v206
  %v208 = vpop.f32.mrb[0].mxu0
  %v209 = vpop.f32.mrb[0].mxu0
  %v210 = vadd.f32 0.0, %v209
  %v211 = vpop.f32.mrb[0].mxu0
  %212 = vmatprep.mubr.bf16.mxu0 0
  %213 = vmatmul.mubr.bf16.gmra.mrb[0].mxu0 %v81
  %v214 = vpop.f32.mrb[0].mxu0
  %v215 = vadd.f32 0.0, %v214
  %v216 = vpop.f32.mrb[0].mxu0
  %v217 = vpop.f32.mrb[0].mxu0
  %v218 = vadd.f32 0.0, %v217
  %v219 = vpop.f32.mrb[0].mxu0
  %220 = vmatprep.mubr.bf16.mxu0 0
  %221 = vmatmul.mubr.bf16.gmra.mrb[0].mxu0 %v82
  %v222 = vpop.f32.mrb[0].mxu0
  %v223 = vadd.f32 0.0, %v222
  %v224 = vpop.f32.mrb[0].mxu0
  %v225 = vpop.f32.mrb[0].mxu0
  %v226 = vadd.f32 0.0, %v225
  %v227 = vpop.f32.mrb[0].mxu0
  %228 = vmatprep.mubr.bf16.mxu0 0
  %229 = vmatmul.mubr.bf16.gmra.mrb[0].mxu0 %v83
  %v230 = vpop.f32.mrb[0].mxu0
  %v231 = vadd.f32 0.0, %v230
  %v232 = vpop.f32.mrb[0].mxu0
  %v233 = vpop.f32.mrb[0].mxu0
  %v234 = vadd.f32 0.0, %v233
  %v235 = vpop.f32.mrb[0].mxu0
  %236 = vdwg.mxu0
  %237 = vst [vmem:[%s2] sm:$0xff] %v175
  %238 = vst [vmem:[%s2 + $0x8] sm:$0xff] %v178
  %239 = vst [vmem:[%s2 + $0x10] sm:$0xff] %v183
  %240 = vst [vmem:[%s2 + $0x18] sm:$0xff] %v186
  %241 = vst [vmem:[%s2 + $0x20] sm:$0xff] %v191
  %242 = vst [vmem:[%s2 + $0x28] sm:$0xff] %v194
  %243 = vst [vmem:[%s2 + $0x30] sm:$0xff] %v199
  %244 = vst [vmem:[%s2 + $0x38] sm:$0xff] %v202
  %245 = vst [vmem:[%s2 + $0x40] sm:$0xff] %v207
  %246 = vst [vmem:[%s2 + $0x48] sm:$0xff] %v210
  %247 = vst [vmem:[%s2 + $0x50] sm:$0xff] %v215
  %248 = vst [vmem:[%s2 + $0x58] sm:$0xff] %v218
  %249 = vst [vmem:[%s2 + $0x60] sm:$0xff] %v223
  %250 = vst [vmem:[%s2 + $0x68] sm:$0xff] %v226
  %251 = vst [vmem:[%s2 + $0x70] sm:$0xff] %v231
  %252 = vst [vmem:[%s2 + $0x78] sm:$0xff] %v234
  // Predicated region
  $region10: #{preact_block_forward.8} parent=0 // pred_check
    _
  $region11: #{preact_block_forward.8} parent=0 // pred_check_branch
    %254 = sbr.rel (0) target = $region13
  $region12: #{preact_block_forward.8} parent=0 // pred_region
    _
  $region13: #{preact_block_forward.8} parent=0 // pred_fallthru
    _
  // Predicated region
  $region14: #{preact_block_forward.8} parent=0 // pred_check
    _
  $region15: #{preact_block_forward.8} parent=0 // pred_check_branch
    %256 = sbr.rel (0) target = $region17
  $region16: #{preact_block_forward.8} parent=0 // pred_region
    _
  $region17: #{preact_block_forward.8} parent=0 // pred_fallthru
    _

// kernel: preact_block_forward.11
$region0: #{preact_block_forward.11}
  #allocation0 [shape = 'u32[]', space=smem, size = 0x4, offset = 0x4, fixed_abs, tag = 'smem constant byte address 0x4 - core index']
  #allocation1 [shape = 'u32[144,128]{1,0:T(1,128)}', space=vmem, size = 0x12000, scoped, tag = 'internal scratch']
  %s0 = inlined_call_operand.vmem [shape: bf16[128,128], index: 0, kind: input, shape index: {}]
  %s1 = inlined_call_operand.vmem [shape: bf16[128,128], index: 1, kind: input, shape index: {}]
  %s2 = inlined_call_operand.vmem [shape: f32[128,128], index: 2, kind: input, shape index: {}]
  %s3 = inlined_call_operand.vmem [shape: f32[128,128], index: 3, kind: output, shape index: {}]
  %s4 = sld [smem:[#allocation0]]
  $region22: #{preact_block_forward.11} parent=0
    _
  %s6 = ssub.s32 1, %s4
  %s7 = scalar_select 0, %s6, %s4
  // Predicated region
  $region2: #{preact_block_forward.11} parent=0 // pred_check
    _
  $region3: #{preact_block_forward.11} parent=0 // pred_check_branch
    %9 = sbr.rel (0) target = $region5
  $region4: #{preact_block_forward.11} parent=0 // pred_region
    _
  $region5: #{preact_block_forward.11} parent=0 // pred_fallthru
    _
  // Predicated region
  $region6: #{preact_block_forward.11} parent=0 // pred_check
    _
  $region7: #{preact_block_forward.11} parent=0 // pred_check_branch
    %11 = sbr.rel (0) target = $region9
  $region8: #{preact_block_forward.11} parent=0 // pred_region
    _
  $region9: #{preact_block_forward.11} parent=0 // pred_fallthru
    _
  // Predicated region
  $region10: #{preact_block_forward.11} parent=0 // pred_check
    _
  $region11: #{preact_block_forward.11} parent=0 // pred_check_branch
    %13 = sbr.rel (0) target = $region13
  $region12: #{preact_block_forward.11} parent=0 // pred_region
    _
  $region13: #{preact_block_forward.11} parent=0 // pred_fallthru
    _
  %v15 = vld [vmem:[%s0] sm:$0xf]
  %v16 = vld [vmem:[%s0 + $0x4] sm:$0xf]
  %v17 = vld [vmem:[%s0 + $0x8] sm:$0xf]
  %v18 = vld [vmem:[%s0 + $0xc] sm:$0xf]
  %v19 = vld [vmem:[%s0 + $0x10] sm:$0xf]
  %v20 = vld [vmem:[%s0 + $0x14] sm:$0xf]
  %v21 = vld [vmem:[%s0 + $0x18] sm:$0xf]
  %v22 = vld [vmem:[%s0 + $0x1c] sm:$0xf]
  %v23 = vld [vmem:[%s0 + $0x20] sm:$0xf]
  %v24 = vld [vmem:[%s0 + $0x24] sm:$0xf]
  %v25 = vld [vmem:[%s0 + $0x28] sm:$0xf]
  %v26 = vld [vmem:[%s0 + $0x2c] sm:$0xf]
  %v27 = vld [vmem:[%s0 + $0x30] sm:$0xf]
  %v28 = vld [vmem:[%s0 + $0x34] sm:$0xf]
  %v29 = vld [vmem:[%s0 + $0x38] sm:$0xf]
  %v30 = vld [vmem:[%s0 + $0x3c] sm:$0xf]
  %v31 = vld [vmem:[%s1] sm:$0xf]
  %v32 = vld [vmem:[%s1 + $0x4] sm:$0xf]
  %v33 = vld [vmem:[%s1 + $0x8] sm:$0xf]
  %v34 = vld [vmem:[%s1 + $0xc] sm:$0xf]
  %v35 = vld [vmem:[%s1 + $0x10] sm:$0xf]
  %v36 = vld [vmem:[%s1 + $0x14] sm:$0xf]
  %v37 = vld [vmem:[%s1 + $0x18] sm:$0xf]
  %v38 = vld [vmem:[%s1 + $0x1c] sm:$0xf]
  %v39 = vld [vmem:[%s1 + $0x20] sm:$0xf]
  %v40 = vld [vmem:[%s1 + $0x24] sm:$0xf]
  %v41 = vld [vmem:[%s1 + $0x28] sm:$0xf]
  %v42 = vld [vmem:[%s1 + $0x2c] sm:$0xf]
  %v43 = vld [vmem:[%s1 + $0x30] sm:$0xf]
  %v44 = vld [vmem:[%s1 + $0x34] sm:$0xf]
  %v45 = vld [vmem:[%s1 + $0x38] sm:$0xf]
  %v46 = vld [vmem:[%s1 + $0x3c] sm:$0xf]
  %v47 = vld [vmem:[%s2] sm:$0xff]
  %v48 = vld [vmem:[%s2 + $0x8] sm:$0xff]
  %v49 = vld [vmem:[%s2 + $0x10] sm:$0xff]
  %v50 = vld [vmem:[%s2 + $0x18] sm:$0xff]
  %v51 = vld [vmem:[%s2 + $0x20] sm:$0xff]
  %v52 = vld [vmem:[%s2 + $0x28] sm:$0xff]
  %v53 = vld [vmem:[%s2 + $0x30] sm:$0xff]
  %v54 = vld [vmem:[%s2 + $0x38] sm:$0xff]
  %v55 = vld [vmem:[%s2 + $0x40] sm:$0xff]
  %v56 = vld [vmem:[%s2 + $0x48] sm:$0xff]
  %v57 = vld [vmem:[%s2 + $0x50] sm:$0xff]
  %v58 = vld [vmem:[%s2 + $0x58] sm:$0xff]
  %v59 = vld [vmem:[%s2 + $0x60] sm:$0xff]
  %v60 = vld [vmem:[%s2 + $0x68] sm:$0xff]
  %v61 = vld [vmem:[%s2 + $0x70] sm:$0xff]
  %v62 = vld [vmem:[%s2 + $0x78] sm:$0xff]
  %v79 = vunpack.c.l.b16 %v15
  %v80 = vunpack.c.l.b16 %v16
  %v81 = vunpack.c.l.b16 %v17
  %v82 = vunpack.c.l.b16 %v18
  %v83 = vunpack.c.l.b16 %v19
  %v84 = vunpack.c.l.b16 %v20
  %v85 = vunpack.c.l.b16 %v21
  %v86 = vunpack.c.l.b16 %v22
  %v87 = vunpack.c.l.b16 %v23
  %v88 = vunpack.c.l.b16 %v24
  %v89 = vunpack.c.l.b16 %v25
  %v90 = vunpack.c.l.b16 %v26
  %v91 = vunpack.c.l.b16 %v27
  %v92 = vunpack.c.l.b16 %v28
  %v93 = vunpack.c.l.b16 %v29
  %v94 = vunpack.c.l.b16 %v30
  %v95 = vpack.c.b16 %v80, %v79
  %v96 = vpack.c.b16 %v82, %v81
  %v97 = vpack.c.b16 %v84, %v83
  %v98 = vpack.c.b16 %v86, %v85
  %v99 = vpack.c.b16 %v88, %v87
  %v100 = vpack.c.b16 %v90, %v89
  %v101 = vpack.c.b16 %v92, %v91
  %v102 = vpack.c.b16 %v94, %v93
  %v127 = vunpack.c.l.b16 %v31
  %v128 = vunpack.c.l.b16 %v32
  %v129 = vunpack.c.l.b16 %v33
  %v130 = vunpack.c.l.b16 %v34
  %v131 = vunpack.c.l.b16 %v35
  %v132 = vunpack.c.l.b16 %v36
  %v133 = vunpack.c.l.b16 %v37
  %v134 = vunpack.c.l.b16 %v38
  %v135 = vunpack.c.l.b16 %v39
  %v136 = vunpack.c.l.b16 %v40
  %v137 = vunpack.c.l.b16 %v41
  %v138 = vunpack.c.l.b16 %v42
  %v139 = vunpack.c.l.b16 %v43
  %v140 = vunpack.c.l.b16 %v44
  %v141 = vunpack.c.l.b16 %v45
  %v142 = vunpack.c.l.b16 %v46
  %v143 = vpack.c.b16 %v128, %v127
  %v144 = vpack.c.b16 %v130, %v129
  %v145 = vpack.c.b16 %v132, %v131
  %v146 = vpack.c.b16 %v134, %v133
  %v147 = vpack.c.b16 %v136, %v135
  %v148 = vpack.c.b16 %v138, %v137
  %v149 = vpack.c.b16 %v140, %v139
  %v150 = vpack.c.b16 %v142, %v141
  %159 = vmatprep.subr.bf16.mxu0 0
  %160 = vmatpush1.bf16.msra.mxu0 %v143
  %161 = vmatprep.subr.bf16.mxu0 0
  %162 = vmatpush1.bf16.msra.mxu0 %v144
  %163 = vmatprep.subr.bf16.mxu0 0
  %164 = vmatpush1.bf16.msra.mxu0 %v145
  %165 = vmatprep.subr.bf16.mxu0 0
  %166 = vmatpush1.bf16.msra.mxu0 %v146
  %167 = vmatprep.subr.bf16.mxu0 0
  %168 = vmatpush1.bf16.msra.mxu0 %v147
  %169 = vmatprep.subr.bf16.mxu0 0
  %170 = vmatpush1.bf16.msra.mxu0 %v148
  %171 = vmatprep.subr.bf16.mxu0 0
  %172 = vmatpush1.bf16.msra.mxu0 %v149
  %173 = vmatprep.subr.bf16.mxu0 0
  %174 = vmatpush1.bf16.msra.mxu0 %v150
  %175 = vmatprep.subr.bf16.mxu0 0
  %176 = vmatpush1.bf16.msra.mxu0 0
  %177 = vmatprep.subr.bf16.mxu0 0
  %178 = vmatpush1.bf16.msra.mxu0 0
  %179 = vmatprep.subr.bf16.mxu0 0
  %180 = vmatpush1.bf16.msra.mxu0 0
  %181 = vmatprep.subr.bf16.mxu0 0
  %182 = vmatpush1.bf16.msra.mxu0 0
  %183 = vmatprep.subr.bf16.mxu0 0
  %184 = vmatpush1.bf16.msra.mxu0 0
  %185 = vmatprep.subr.bf16.mxu0 0
  %186 = vmatpush1.bf16.msra.mxu0 0
  %187 = vmatprep.subr.bf16.mxu0 0
  %188 = vmatpush1.bf16.msra.mxu0 0
  %189 = vmatprep.subr.bf16.mxu0 0
  %190 = vmatpush1.bf16.msra.mxu0 0
  %191 = vmatprep.mubr.bf16.mxu0 0
  %192 = vmatmul.mubr.bf16.gmra.mrb[0].mxu0 %v95
  %v193 = vpop.f32.mrb[0].mxu0
  %v194 = vadd.f32 %v47, %v193
  %v195 = vpop.f32.mrb[0].mxu0
  %v196 = vpop.f32.mrb[0].mxu0
  %v197 = vadd.f32 %v48, %v196
  %v198 = vpop.f32.mrb[0].mxu0
  %199 = vmatprep.mubr.bf16.mxu0 0
  %200 = vmatmul.mubr.bf16.gmra.mrb[0].mxu0 %v96
  %v201 = vpop.f32.mrb[0].mxu0
  %v202 = vadd.f32 %v49, %v201
  %v203 = vpop.f32.mrb[0].mxu0
  %v204 = vpop.f32.mrb[0].mxu0
  %v205 = vadd.f32 %v50, %v204
  %v206 = vpop.f32.mrb[0].mxu0
  %207 = vmatprep.mubr.bf16.mxu0 0
  %208 = vmatmul.mubr.bf16.gmra.mrb[0].mxu0 %v97
  %v209 = vpop.f32.mrb[0].mxu0
  %v210 = vadd.f32 %v51, %v209
  %v211 = vpop.f32.mrb[0].mxu0
  %v212 = vpop.f32.mrb[0].mxu0
  %v213 = vadd.f32 %v52, %v212
  %v214 = vpop.f32.mrb[0].mxu0
  %215 = vmatprep.mubr.bf16.mxu0 0
  %216 = vmatmul.mubr.bf16.gmra.mrb[0].mxu0 %v98
  %v217 = vpop.f32.mrb[0].mxu0
  %v218 = vadd.f32 %v53, %v217
  %v219 = vpop.f32.mrb[0].mxu0
  %v220 = vpop.f32.mrb[0].mxu0
  %v221 = vadd.f32 %v54, %v220
  %v222 = vpop.f32.mrb[0].mxu0
  %223 = vmatprep.mubr.bf16.mxu0 0
  %224 = vmatmul.mubr.bf16.gmra.mrb[0].mxu0 %v99
  %v225 = vpop.f32.mrb[0].mxu0
  %v226 = vadd.f32 %v55, %v225
  %v227 = vpop.f32.mrb[0].mxu0
  %v228 = vpop.f32.mrb[0].mxu0
  %v229 = vadd.f32 %v56, %v228
  %v230 = vpop.f32.mrb[0].mxu0
  %231 = vmatprep.mubr.bf16.mxu0 0
  %232 = vmatmul.mubr.bf16.gmra.mrb[0].mxu0 %v100
  %v233 = vpop.f32.mrb[0].mxu0
  %v234 = vadd.f32 %v57, %v233
  %v235 = vpop.f32.mrb[0].mxu0
  %v236 = vpop.f32.mrb[0].mxu0
  %v237 = vadd.f32 %v58, %v236
  %v238 = vpop.f32.mrb[0].mxu0
  %239 = vmatprep.mubr.bf16.mxu0 0
  %240 = vmatmul.mubr.bf16.gmra.mrb[0].mxu0 %v101
  %v241 = vpop.f32.mrb[0].mxu0
  %v242 = vadd.f32 %v59, %v241
  %v243 = vpop.f32.mrb[0].mxu0
  %v244 = vpop.f32.mrb[0].mxu0
  %v245 = vadd.f32 %v60, %v244
  %v246 = vpop.f32.mrb[0].mxu0
  %247 = vmatprep.mubr.bf16.mxu0 0
  %248 = vmatmul.mubr.bf16.gmra.mrb[0].mxu0 %v102
  %v249 = vpop.f32.mrb[0].mxu0
  %v250 = vadd.f32 %v61, %v249
  %v251 = vpop.f32.mrb[0].mxu0
  %v252 = vpop.f32.mrb[0].mxu0
  %v253 = vadd.f32 %v62, %v252
  %v254 = vpop.f32.mrb[0].mxu0
  %255 = vdwg.mxu0
  %256 = vst [vmem:[%s3] sm:$0xff] %v194
  %257 = vst [vmem:[%s3 + $0x8] sm:$0xff] %v197
  %258 = vst [vmem:[%s3 + $0x10] sm:$0xff] %v202
  %259 = vst [vmem:[%s3 + $0x18] sm:$0xff] %v205
  %260 = vst [vmem:[%s3 + $0x20] sm:$0xff] %v210
  %261 = vst [vmem:[%s3 + $0x28] sm:$0xff] %v213
  %262 = vst [vmem:[%s3 + $0x30] sm:$0xff] %v218
  %263 = vst [vmem:[%s3 + $0x38] sm:$0xff] %v221
  %264 = vst [vmem:[%s3 + $0x40] sm:$0xff] %v226
  %265 = vst [vmem:[%s3 + $0x48] sm:$0xff] %v229
  %266 = vst [vmem:[%s3 + $0x50] sm:$0xff] %v234
  %267 = vst [vmem:[%s3 + $0x58] sm:$0xff] %v237
  %268 = vst [vmem:[%s3 + $0x60] sm:$0xff] %v242
  %269 = vst [vmem:[%s3 + $0x68] sm:$0xff] %v245
  %270 = vst [vmem:[%s3 + $0x70] sm:$0xff] %v250
  %271 = vst [vmem:[%s3 + $0x78] sm:$0xff] %v253
  // Predicated region
  $region14: #{preact_block_forward.11} parent=0 // pred_check
    _
  $region15: #{preact_block_forward.11} parent=0 // pred_check_branch
    %273 = sbr.rel (0) target = $region17
  $region16: #{preact_block_forward.11} parent=0 // pred_region
    _
  $region17: #{preact_block_forward.11} parent=0 // pred_fallthru
    _
  // Predicated region
  $region18: #{preact_block_forward.11} parent=0 // pred_check
    _
  $region19: #{preact_block_forward.11} parent=0 // pred_check_branch
    %275 = sbr.rel (0) target = $region21
  $region20: #{preact_block_forward.11} parent=0 // pred_region
    _
  $region21: #{preact_block_forward.11} parent=0 // pred_fallthru
    _

</llo_original>
